<compile_context>
chip_gen: v7x
topology: tpu7x:2x2x1
jax: 0.10.0
libtpu: 0.0.40
codegen_flags: <defaults>
</compile_context>

<pallas_src>
import functools

import jax
import jax.numpy as jnp
from jax.experimental import pallas as pl
from jax.experimental.pallas import tpu as pltpu


_NUM_CLASSES = 2
_CONV_TN = 256        # cout tile: fills the 256-wide MXU on v6e/v7x
_CONV_MAX_ROWS = 128  # row tile: f32 accumulator <= 128x256x4 B = 128 KiB (fits vregs)

# (cin, cout, kernel, padding) per conv, 'M' = MaxPool2d(2, 2).  Matches the
# torch spec (including the kernel_size=1, padding=1 convs, which grow the
# spatial dims by 2).
_FEATURES_CFG = [
    (1, 32, 3, 1), (32, 32, 3, 1), 'M',
    (32, 64, 3, 1), (64, 64, 3, 1), 'M',
    (64, 128, 3, 1), (128, 128, 3, 1), 'M',
    (128, 256, 3, 1), (256, 256, 3, 1), (256, 256, 1, 1), 'M',
    (256, 512, 3, 1), (512, 512, 3, 1), (512, 512, 1, 1), 'M',
    (512, 1024, 3, 1), (1024, 1024, 3, 1), (1024, 1024, 1, 1), 'M',
]


def _round_up(x, m):
    return (x + m - 1) // m * m


def _fc1_tiles():
    """(tk, tn) for the fc1 weight stream, chosen per TPU generation.

    Fallback (tn=512) is safe on every generation: 7.3 MiB double-buffered
    weight (fits v5e's 16 MiB default scoped VMEM) and 2 "parallel" N tiles so
    v7x's two TensorCores stream disjoint halves of the ~103 MB fc1 weight.
    """
    try:
        kind = jax.devices()[0].device_kind.lower()
    except Exception:
        kind = ''
    if 'v6' in kind:
        return 3584, 1024   # 14 contiguous K steps, ~14.7 MiB double-buffered
    return 3584, 512


# ---------------------------------------------------------------------------
# Pallas kernels
# ---------------------------------------------------------------------------
def _conv_tap_kernel(a_ref, w_ref, s_ref, b_ref, o_ref, *, taps, tr, relu):
    """Conv as a sum of shifted matmuls (no im2col), one (row tile, cout tile).

    a_ref : (rows_p + tail, Cin_p)  f32   whole flattened, padded activation
    w_ref : (KH*KW, Cin_p, tn)      bf16  one contiguous output-channel tile
    s_ref : (1, tn)                 f32   folded BatchNorm scale
    b_ref : (1, tn)                 f32   folded BatchNorm + conv bias
    o_ref : (tr, tn)                f32   one row tile of the "wide" output
    """
    row0 = pl.multiple_of(pl.program_id(0) * tr, 8)
    tn = o_ref.shape[1]
    acc = jnp.zeros((tr, tn), jnp.float32)
    for t, off in enumerate(taps):
        a = a_ref[pl.ds(row0 + off, tr), :].astype(jnp.bfloat16)   # bf16 MXU input
        acc = acc + jnp.dot(a, w_ref[t], preferred_element_type=jnp.float32)
    y = acc * s_ref[...] + b_ref[...]
    if relu:
        y = jnp.maximum(y, 0.0)
    o_ref[...] = y.astype(o_ref.dtype)


def _maxpool_kernel(x_ref, o_ref):
    """2x2 / stride-2 max pool.  x_ref: (n*ho, 2, wo, 2*c) -> o_ref: (n*ho, wo, c)."""
    c = o_ref.shape[-1]
    v = x_ref[...]
    vh = jnp.maximum(v[:, 0], v[:, 1])                    # H pair: major-axis select
    o_ref[...] = jnp.maximum(vh[..., :c], vh[..., c:])    # W pair: lane-aligned slice


def _matmul_affine_kernel(a_ref, b_ref, s_ref, c_ref, o_ref, acc_ref, *, relu):
    """out = relu?((A @ B) * scale + bias); K is the last (reduction) grid axis."""
    k = pl.program_id(2)

    @pl.when(k == 0)
    def _():
        acc_ref[...] = jnp.zeros_like(acc_ref)

    acc_ref[...] += jnp.dot(a_ref[...], b_ref[...],
                            preferred_element_type=jnp.float32)

    @pl.when(k == pl.num_programs(2) - 1)
    def _():
        y = acc_ref[...] * s_ref[...] + c_ref[...]
        if relu:
            y = jnp.maximum(y, 0.0)
        o_ref[...] = y.astype(o_ref.dtype)


def _linear_softmax_kernel(a_ref, b_ref, c_ref, o_ref):
    z = jnp.dot(a_ref[...], b_ref[...],
                preferred_element_type=jnp.float32) + c_ref[...]
    z = z - jnp.max(z, axis=-1, keepdims=True)
    e = jnp.exp(z)
    o_ref[...] = (e / jnp.sum(e, axis=-1, keepdims=True)).astype(o_ref.dtype)


# ---------------------------------------------------------------------------
# Pallas wrappers
# ---------------------------------------------------------------------------
def conv_bn_relu(x, layer):
    """Conv2d + folded BatchNorm2d(eval) + ReLU.

    x: (N, H, W, Cin_p) f32 with channels already padded to a multiple of 128.
    layer['w']: (n_ct*KH*KW, Cin_p, tn) bf16 (per-cout-tile contiguous);
    scale/bias: (1, Cout_p) f32.
    """
    n, h, w_, cin_p = x.shape
    kh, kw, p, tn = layer['kh'], layer['kw'], layer['pad'], layer['tn']
    w_mat = layer['w']
    n_ct = w_mat.shape[0] // (kh * kw)
    cout_p = n_ct * tn
    hp, wp = h + 2 * p, w_ + 2 * p
    ho, wo = hp - kh + 1, wp - kw + 1
    rows = n * hp * wp                         # "wide" output rows (garbage sliced off)
    tail = (kh - 1) * wp + (kw - 1)            # zero rows so every tap slice is in-bounds
    taps = tuple(dy * wp + dx for dy in range(kh) for dx in range(kw))

    # Row tiling: accumulator per grid step is (tr, tn) f32 and fits the vreg file.
    rows_p = _round_up(rows, 8)
    if rows_p > _CONV_MAX_ROWS:
        rows_p = _round_up(rows, _CONV_MAX_ROWS)
        tr = _CONV_MAX_ROWS
    else:
        tr = rows_p
    n_rt = rows_p // tr

    xp = jnp.pad(x, ((0, 0), (p, p), (p, p), (0, 0)))
    a = xp.reshape(rows, cin_p)                # free row-major reshape
    extra = (rows_p - rows) + tail             # zero rows: tap slices + row-tile pad
    if extra:
        a = jnp.pad(a, ((0, extra), (0, 0)))

    z = pl.pallas_call(
        functools.partial(_conv_tap_kernel, taps=taps, tr=tr, relu=True),
        out_shape=jax.ShapeDtypeStruct((rows_p, cout_p), jnp.float32),
        grid_spec=pltpu.PrefetchScalarGridSpec(
            num_scalar_prefetch=0,
            grid=(n_rt, n_ct),
            in_specs=[
                # whole (tiny) activation stays VMEM-resident across the grid
                pl.BlockSpec((rows_p + tail, cin_p), lambda i, j: (0, 0)),
                # one contiguous cout tile of the weights per step
                pl.BlockSpec((kh * kw, cin_p, tn), lambda i, j: (j, 0, 0)),
                pl.BlockSpec((1, tn), lambda i, j: (0, j)),
                pl.BlockSpec((1, tn), lambda i, j: (0, j)),
            ],
            out_specs=pl.BlockSpec((tr, tn), lambda i, j: (i, j)),
        ),
        compiler_params=pltpu.CompilerParams(
            dimension_semantics=("parallel", "parallel")),
    )(a, w_mat, layer['scale'], layer['bias'])

    # Keep only the valid output positions (free reshape + one small slice).
    return z[:rows].reshape(n, hp, wp, cout_p)[:, :ho, :wo, :]


def maxpool2x2(x):
    """MaxPool2d(kernel=2, stride=2) on NHWC, single contiguous input DMA."""
    n, h, w, c = x.shape
    ho, wo = h // 2, w // 2
    if h != 2 * ho or w != 2 * wo:             # PyTorch floors: drop trailing row/col
        x = x[:, :2 * ho, :2 * wo, :]
    xr = x.reshape(n * ho, 2, wo, 2 * c)       # free row-major regrouping
    vspec = pl.BlockSpec(memory_space=pltpu.MemorySpace.VMEM)
    y = pl.pallas_call(
        _maxpool_kernel,
        out_shape=jax.ShapeDtypeStruct((n * ho, wo, c), x.dtype),
        in_specs=[vspec],
        out_specs=vspec,
    )(xr)
    return y.reshape(n, ho, wo, c)


def matmul_affine(a, b_tiled, scale, bias, *, relu, K, N, tk, tn):
    """(M,K)@(K,N) * scale + bias (+ReLU); bf16 inputs, f32 VMEM accumulator.

    b_tiled is pre-sharded as ((N//tn)*K, tn) so every streamed (tk, tn) block
    is contiguous in HBM.
    """
    M = a.shape[0]
    assert a.shape[1] == K and K % tk == 0 and N % tn == 0
    assert b_tiled.shape == ((N // tn) * K, tn)
    Mp = max(_round_up(M, 8), 8)
    if Mp != M:
        a = jnp.pad(a, ((0, Mp - M), (0, 0)))
    ksteps = K // tk
    grid = (1, N // tn, ksteps)

    out = pl.pallas_call(
        functools.partial(_matmul_affine_kernel, relu=relu),
        out_shape=jax.ShapeDtypeStruct((Mp, N), jnp.float32),
        grid_spec=pltpu.PrefetchScalarGridSpec(
            num_scalar_prefetch=0,
            grid=grid,
            in_specs=[
                pl.BlockSpec((Mp, tk), lambda i, j, k: (i, k)),
                pl.BlockSpec((tk, tn), lambda i, j, k: (j * ksteps + k, 0)),
                pl.BlockSpec((1, tn), lambda i, j, k: (0, j)),
                pl.BlockSpec((1, tn), lambda i, j, k: (0, j)),
            ],
            out_specs=pl.BlockSpec((Mp, tn), lambda i, j, k: (i, j)),
            scratch_shapes=[pltpu.VMEM((Mp, tn), jnp.float32)],
        ),
        compiler_params=pltpu.CompilerParams(
            dimension_semantics=("parallel", "parallel", "arbitrary")),
    )(a, b_tiled, scale, bias)
    return out[:M]


def adaptive_avg_pool(x, out_hw):
    """nn.AdaptiveAvgPool2d semantics as two tiny averaging linear maps (glue)."""
    n, h, w, c = x.shape
    oh, ow = out_hw

    def avg_matrix(insz, outsz):
        rows = []
        for i in range(outsz):
            s = (i * insz) // outsz
            e = -((-(i + 1) * insz) // outsz)  # ceil
            row = [0.0] * insz
            for j in range(s, e):
                row[j] = 1.0 / (e - s)
            rows.append(row)
        return jnp.array(rows, dtype=jnp.float32)

    ph = avg_matrix(h, oh)   # (oh, h)
    pw = avg_matrix(w, ow)   # (ow, w)
    x32 = x.astype(jnp.float32)
    y = jnp.einsum('oh,nhwc->nowc', ph, x32)
    y = jnp.einsum('pw,nowc->nopc', pw, y)
    return y                 # (n, oh, ow, c) f32


# ---------------------------------------------------------------------------
# Model: parameters + forward
# ---------------------------------------------------------------------------
def init_params(key):
    """Raw parameters in PyTorch-equivalent layouts (conv w == torch w.permute(2,3,1,0),
    fc w == torch w.T)."""
    feats = []
    for idx, item in enumerate(_FEATURES_CFG):
        if item == 'M':
            feats.append('M')
            continue
        cin, cout, k, p = item
        kk = jax.random.fold_in(key, idx)
        kw_, kb, kg, kbt = jax.random.split(kk, 4)
        w = jax.random.normal(kw_, (k, k, cin, cout), jnp.float32)
        w = w * (1.0 / (k * k * cin) ** 0.5)
        b = 0.01 * jax.random.normal(kb, (cout,), jnp.float32)
        gamma = 1.0 + 0.1 * jax.random.normal(kg, (cout,), jnp.float32)
        beta = 0.1 * jax.random.normal(kbt, (cout,), jnp.float32)
        feats.append(dict(w=w, b=b, gamma=gamma, beta=beta,
                          rmean=jnp.zeros((cout,), jnp.float32),
                          rvar=jnp.ones((cout,), jnp.float32),
                          pad=p))
    kf1, kf2 = jax.random.split(jax.random.fold_in(key, 1000), 2)
    fc_in = 1024 * 7 * 7
    return dict(
        features=feats,
        fc1_w=jax.random.normal(kf1, (fc_in, 1024), jnp.float32) * (1.0 / fc_in ** 0.5),
        fc1_b=jnp.zeros((1024,), jnp.float32),
        fc2_w=jax.random.normal(kf2, (1024, _NUM_CLASSES), jnp.float32) * (1.0 / 1024 ** 0.5),
        fc2_b=jnp.zeros((_NUM_CLASSES,), jnp.float32),
    )


def prepare_params(params, eps=1e-5):
    """One-time prep: fold BN (eval mode), pad channels to 128, cast big
    weights to bf16, permute fc1 rows to the NHWC flatten order, and pre-shard
    every streamed weight so each DMA'd block is contiguous in HBM."""
    feats = []
    last_cout = last_cout_p = None
    for layer in params['features']:
        if layer == 'M':
            feats.append('M')
            continue
        w = layer['w']                               # (kh, kw, cin, cout)
        kh, kw_, cin, cout = w.shape
        cin_p = _round_up(cin, 128)
        cout_p = _round_up(cout, 128)
        tn = min(_CONV_TN, cout_p)
        n_ct = cout_p // tn
        scale = layer['gamma'] / jnp.sqrt(layer['rvar'] + eps)
        bias = layer['beta'] - layer['rmean'] * scale + layer['b'] * scale
        w_p = jnp.pad(w, ((0, 0), (0, 0), (0, cin_p - cin), (0, cout_p - cout)))
        # Pre-shard by cout tile: (n_ct * kh*kw, cin_p, tn), tile-major, so the
        # BlockSpec tile axis picks a fully contiguous HBM chunk per grid step.
        w_p = w_p.reshape(kh * kw_, cin_p, n_ct, tn)
        w_p = jnp.transpose(w_p, (2, 0, 1, 3)).reshape(n_ct * kh * kw_, cin_p, tn)
        scale_p = jnp.pad(scale, (0, cout_p - cout), constant_values=1.0)
        bias_p = jnp.pad(bias, (0, cout_p - cout))
        feats.append(dict(
            w=w_p.astype(jnp.bfloat16),
            scale=scale_p.reshape(1, cout_p).astype(jnp.float32),
            bias=bias_p.reshape(1, cout_p).astype(jnp.float32),
            kh=kh, kw=kw_, pad=layer['pad'], tn=tn,
        ))
        last_cout, last_cout_p = cout, cout_p

    # The NHWC flatten feeding fc1 must contain no channel padding.
    assert last_cout == last_cout_p, "last conv width must be a multiple of 128"
    fc_in, fc_mid = params['fc1_w'].shape
    assert fc_in == last_cout * 7 * 7

    tk, tn = _fc1_tiles()
    # fc1 rows: PyTorch flattens NCHW as (c, h, w); we flatten NHWC as (h, w, c).
    fc1 = params['fc1_w'].reshape(last_cout, 7, 7, fc_mid)
    fc1 = jnp.transpose(fc1, (1, 2, 0, 3)).reshape(fc_in, fc_mid)
    # Pre-shard by N tile: ((N//tn)*K, tn) so every streamed (tk, tn) block is
    # a single contiguous HBM chunk (fc1 is the largest HBM consumer).
    n_jt = fc_mid // tn
    fc1 = fc1.reshape(fc_in, n_jt, tn)
    fc1 = jnp.transpose(fc1, (1, 0, 2)).reshape(n_jt * fc_in, tn)
    return dict(
        features=feats,
        fc1_w=fc1.astype(jnp.bfloat16),
        fc1_scale=jnp.ones((1, fc_mid), jnp.float32),
        fc1_bias=params['fc1_b'].reshape(1, fc_mid).astype(jnp.float32),
        fc1_tk=tk, fc1_tn=tn, fc1_k=fc_in, fc1_n=fc_mid,
        fc2_w=params['fc2_w'].astype(jnp.float32),
        fc2_b=params['fc2_b'].reshape(1, _NUM_CLASSES).astype(jnp.float32),
    )


def vgg_forward(prep, x_nchw):
    x = jnp.transpose(x_nchw, (0, 2, 3, 1)).astype(jnp.float32)   # NCHW -> NHWC
    cin_p = prep['features'][0]['w'].shape[1]
    x = jnp.pad(x, ((0, 0), (0, 0), (0, 0), (0, cin_p - x.shape[3])))

    for layer in prep['features']:
        if layer == 'M':
            x = maxpool2x2(x)
        else:
            x = conv_bn_relu(x, layer)

    x = adaptive_avg_pool(x, (7, 7))                      # (N, 7, 7, 1024) f32
    n = x.shape[0]
    x = x.reshape(n, -1).astype(jnp.bfloat16)             # NHWC flatten (fc1 rows pre-permuted)

    # Linear(50176 -> 1024) + ReLU: contiguous bf16 weight stream.
    x = matmul_affine(x, prep['fc1_w'], prep['fc1_scale'], prep['fc1_bias'],
                      relu=True, K=prep['fc1_k'], N=prep['fc1_n'],
                      tk=prep['fc1_tk'], tn=prep['fc1_tn'])          # (N, 1024) f32

    # Linear(1024 -> num_classes) + Softmax(dim=1): one small whole-VMEM kernel.
    vspec = pl.BlockSpec(memory_space=pltpu.MemorySpace.VMEM)
    out = pl.pallas_call(
        _linear_softmax_kernel,
        out_shape=jax.ShapeDtypeStruct((n, _NUM_CLASSES), jnp.float32),
        in_specs=[vspec, vspec, vspec],
        out_specs=vspec,
    )(x, prep['fc2_w'], prep['fc2_b'])
    return out


if __name__ == "__main__":
    key = jax.random.PRNGKey(0)
    params = init_params(key)
    prep = prepare_params(params)
    # Input matches nn.Conv2d(1, ...): NCHW, 1 channel, small 16x16 spatial.
    x = jax.random.normal(jax.random.fold_in(key, 7), (2, 1, 16, 16), jnp.float32)
    out = vgg_forward(prep, x)
    out = jax.block_until_ready(out)
    assert out.shape == (2, _NUM_CLASSES)
    assert bool(jnp.all(jnp.isfinite(out)))
    print("KERNEL_OK")
</pallas_src>

<mosaic_0001>
module attributes {stable_mosaic.version = 11 : i64} {
  func.func @_conv_tap_kernel(%arg0: i32, %arg1: i32, %arg2: memref<806x128xf32, #tpu.memory_space<vmem>>, %arg3: memref<9x128x128xbf16, #tpu.memory_space<vmem>>, %arg4: memref<1x128xf32, #tpu.memory_space<vmem>>, %arg5: memref<1x128xf32, #tpu.memory_space<vmem>>, %arg6: memref<128x128xf32, #tpu.memory_space<vmem>>) attributes {dimension_semantics = [#tpu.dimension_semantics<parallel>, #tpu.dimension_semantics<parallel>], iteration_bounds = array<i64: 6, 1>, scalar_prefetch = 0 : i64, scratch_operands = 0 : i64, tpu.core_type = #tpu.core_type<tc>, window_params = [{pipeline_mode = #tpu.pipeline_mode<synchronous>, transform_indices = @transform_0, window_bounds = array<i64: 806, 128>}, {transform_indices = @transform_1, window_bounds = array<i64: 9, 128, 128>}, {transform_indices = @transform_2, window_bounds = array<i64: 1, 128>}, {transform_indices = @transform_3, window_bounds = array<i64: 1, 128>}, {transform_indices = @transform_4, window_bounds = array<i64: 128, 128>}]} {
    %c128_i32 = arith.constant 128 : i32
    %0 = arith.muli %arg0, %c128_i32 : i32
    %1 = tpu.assume_multiple %0, 8 : i32
    %cst = arith.constant 0.000000e+00 : f32
    %2 = vector.broadcast %cst : f32 to vector<128x128xf32>
    %c0_i32 = arith.constant 0 : i32
    %3 = arith.addi %1, %c0_i32 : i32
    %4 = arith.index_cast %3 : i32 to index
    %c0 = arith.constant 0 : index
    %5 = vector.load %arg2[%4, %c0] : memref<806x128xf32, #tpu.memory_space<vmem>>, vector<128x128xf32>
    %6 = arith.truncf %5 : vector<128x128xf32> to vector<128x128xbf16>
    %c0_0 = arith.constant 0 : index
    %c0_1 = arith.constant 0 : index
    %c0_2 = arith.constant 0 : index
    %7 = vector.load %arg3[%c0_0, %c0_1, %c0_2] : memref<9x128x128xbf16, #tpu.memory_space<vmem>>, vector<1x128x128xbf16>
    %8 = vector.shape_cast %7 : vector<1x128x128xbf16> to vector<128x128xbf16>
    %cst_3 = arith.constant dense<0.000000e+00> : vector<128x128xf32>
    %9 = tpu.matmul %6, %8, %cst_3 {dimension_numbers = #tpu.dot_dimension_numbers<[1], [0], [0], [1], [0, 0, 1, 1], [], []>} : vector<128x128xbf16>, vector<128x128xbf16>, vector<128x128xf32> -> vector<128x128xf32>
    %10 = arith.addf %2, %9 : vector<128x128xf32>
    %c1_i32 = arith.constant 1 : i32
    %11 = arith.addi %1, %c1_i32 : i32
    %12 = arith.index_cast %11 : i32 to index
    %c0_4 = arith.constant 0 : index
    %13 = vector.load %arg2[%12, %c0_4] : memref<806x128xf32, #tpu.memory_space<vmem>>, vector<128x128xf32>
    %14 = arith.truncf %13 : vector<128x128xf32> to vector<128x128xbf16>
    %c1 = arith.constant 1 : index
    %c0_5 = arith.constant 0 : index
    %c0_6 = arith.constant 0 : index
    %15 = vector.load %arg3[%c1, %c0_5, %c0_6] : memref<9x128x128xbf16, #tpu.memory_space<vmem>>, vector<1x128x128xbf16>
    %16 = vector.shape_cast %15 : vector<1x128x128xbf16> to vector<128x128xbf16>
    %cst_7 = arith.constant dense<0.000000e+00> : vector<128x128xf32>
    %17 = tpu.matmul %14, %16, %cst_7 {dimension_numbers = #tpu.dot_dimension_numbers<[1], [0], [0], [1], [0, 0, 1, 1], [], []>} : vector<128x128xbf16>, vector<128x128xbf16>, vector<128x128xf32> -> vector<128x128xf32>
    %18 = arith.addf %10, %17 : vector<128x128xf32>
    %c2_i32 = arith.constant 2 : i32
    %19 = arith.addi %1, %c2_i32 : i32
    %20 = arith.index_cast %19 : i32 to index
    %c0_8 = arith.constant 0 : index
    %21 = vector.load %arg2[%20, %c0_8] : memref<806x128xf32, #tpu.memory_space<vmem>>, vector<128x128xf32>
    %22 = arith.truncf %21 : vector<128x128xf32> to vector<128x128xbf16>
    %c2 = arith.constant 2 : index
    %c0_9 = arith.constant 0 : index
    %c0_10 = arith.constant 0 : index
    %23 = vector.load %arg3[%c2, %c0_9, %c0_10] : memref<9x128x128xbf16, #tpu.memory_space<vmem>>, vector<1x128x128xbf16>
    %24 = vector.shape_cast %23 : vector<1x128x128xbf16> to vector<128x128xbf16>
    %cst_11 = arith.constant dense<0.000000e+00> : vector<128x128xf32>
    %25 = tpu.matmul %22, %24, %cst_11 {dimension_numbers = #tpu.dot_dimension_numbers<[1], [0], [0], [1], [0, 0, 1, 1], [], []>} : vector<128x128xbf16>, vector<128x128xbf16>, vector<128x128xf32> -> vector<128x128xf32>
    %26 = arith.addf %18, %25 : vector<128x128xf32>
    %c18_i32 = arith.constant 18 : i32
    %27 = arith.addi %1, %c18_i32 : i32
    %28 = arith.index_cast %27 : i32 to index
    %c0_12 = arith.constant 0 : index
    %29 = vector.load %arg2[%28, %c0_12] : memref<806x128xf32, #tpu.memory_space<vmem>>, vector<128x128xf32>
    %30 = arith.truncf %29 : vector<128x128xf32> to vector<128x128xbf16>
    %c3 = arith.constant 3 : index
    %c0_13 = arith.constant 0 : index
    %c0_14 = arith.constant 0 : index
    %31 = vector.load %arg3[%c3, %c0_13, %c0_14] : memref<9x128x128xbf16, #tpu.memory_space<vmem>>, vector<1x128x128xbf16>
    %32 = vector.shape_cast %31 : vector<1x128x128xbf16> to vector<128x128xbf16>
    %cst_15 = arith.constant dense<0.000000e+00> : vector<128x128xf32>
    %33 = tpu.matmul %30, %32, %cst_15 {dimension_numbers = #tpu.dot_dimension_numbers<[1], [0], [0], [1], [0, 0, 1, 1], [], []>} : vector<128x128xbf16>, vector<128x128xbf16>, vector<128x128xf32> -> vector<128x128xf32>
    %34 = arith.addf %26, %33 : vector<128x128xf32>
    %c19_i32 = arith.constant 19 : i32
    %35 = arith.addi %1, %c19_i32 : i32
    %36 = arith.index_cast %35 : i32 to index
    %c0_16 = arith.constant 0 : index
    %37 = vector.load %arg2[%36, %c0_16] : memref<806x128xf32, #tpu.memory_space<vmem>>, vector<128x128xf32>
    %38 = arith.truncf %37 : vector<128x128xf32> to vector<128x128xbf16>
    %c4 = arith.constant 4 : index
    %c0_17 = arith.constant 0 : index
    %c0_18 = arith.constant 0 : index
    %39 = vector.load %arg3[%c4, %c0_17, %c0_18] : memref<9x128x128xbf16, #tpu.memory_space<vmem>>, vector<1x128x128xbf16>
    %40 = vector.shape_cast %39 : vector<1x128x128xbf16> to vector<128x128xbf16>
    %cst_19 = arith.constant dense<0.000000e+00> : vector<128x128xf32>
    %41 = tpu.matmul %38, %40, %cst_19 {dimension_numbers = #tpu.dot_dimension_numbers<[1], [0], [0], [1], [0, 0, 1, 1], [], []>} : vector<128x128xbf16>, vector<128x128xbf16>, vector<128x128xf32> -> vector<128x128xf32>
    %42 = arith.addf %34, %41 : vector<128x128xf32>
    %c20_i32 = arith.constant 20 : i32
    %43 = arith.addi %1, %c20_i32 : i32
    %44 = arith.index_cast %43 : i32 to index
    %c0_20 = arith.constant 0 : index
    %45 = vector.load %arg2[%44, %c0_20] : memref<806x128xf32, #tpu.memory_space<vmem>>, vector<128x128xf32>
    %46 = arith.truncf %45 : vector<128x128xf32> to vector<128x128xbf16>
    %c5 = arith.constant 5 : index
    %c0_21 = arith.constant 0 : index
    %c0_22 = arith.constant 0 : index
    %47 = vector.load %arg3[%c5, %c0_21, %c0_22] : memref<9x128x128xbf16, #tpu.memory_space<vmem>>, vector<1x128x128xbf16>
    %48 = vector.shape_cast %47 : vector<1x128x128xbf16> to vector<128x128xbf16>
    %cst_23 = arith.constant dense<0.000000e+00> : vector<128x128xf32>
    %49 = tpu.matmul %46, %48, %cst_23 {dimension_numbers = #tpu.dot_dimension_numbers<[1], [0], [0], [1], [0, 0, 1, 1], [], []>} : vector<128x128xbf16>, vector<128x128xbf16>, vector<128x128xf32> -> vector<128x128xf32>
    %50 = arith.addf %42, %49 : vector<128x128xf32>
    %c36_i32 = arith.constant 36 : i32
    %51 = arith.addi %1, %c36_i32 : i32
    %52 = arith.index_cast %51 : i32 to index
    %c0_24 = arith.constant 0 : index
    %53 = vector.load %arg2[%52, %c0_24] : memref<806x128xf32, #tpu.memory_space<vmem>>, vector<128x128xf32>
    %54 = arith.truncf %53 : vector<128x128xf32> to vector<128x128xbf16>
    %c6 = arith.constant 6 : index
    %c0_25 = arith.constant 0 : index
    %c0_26 = arith.constant 0 : index
    %55 = vector.load %arg3[%c6, %c0_25, %c0_26] : memref<9x128x128xbf16, #tpu.memory_space<vmem>>, vector<1x128x128xbf16>
    %56 = vector.shape_cast %55 : vector<1x128x128xbf16> to vector<128x128xbf16>
    %cst_27 = arith.constant dense<0.000000e+00> : vector<128x128xf32>
    %57 = tpu.matmul %54, %56, %cst_27 {dimension_numbers = #tpu.dot_dimension_numbers<[1], [0], [0], [1], [0, 0, 1, 1], [], []>} : vector<128x128xbf16>, vector<128x128xbf16>, vector<128x128xf32> -> vector<128x128xf32>
    %58 = arith.addf %50, %57 : vector<128x128xf32>
    %c37_i32 = arith.constant 37 : i32
    %59 = arith.addi %1, %c37_i32 : i32
    %60 = arith.index_cast %59 : i32 to index
    %c0_28 = arith.constant 0 : index
    %61 = vector.load %arg2[%60, %c0_28] : memref<806x128xf32, #tpu.memory_space<vmem>>, vector<128x128xf32>
    %62 = arith.truncf %61 : vector<128x128xf32> to vector<128x128xbf16>
    %c7 = arith.constant 7 : index
    %c0_29 = arith.constant 0 : index
    %c0_30 = arith.constant 0 : index
    %63 = vector.load %arg3[%c7, %c0_29, %c0_30] : memref<9x128x128xbf16, #tpu.memory_space<vmem>>, vector<1x128x128xbf16>
    %64 = vector.shape_cast %63 : vector<1x128x128xbf16> to vector<128x128xbf16>
    %cst_31 = arith.constant dense<0.000000e+00> : vector<128x128xf32>
    %65 = tpu.matmul %62, %64, %cst_31 {dimension_numbers = #tpu.dot_dimension_numbers<[1], [0], [0], [1], [0, 0, 1, 1], [], []>} : vector<128x128xbf16>, vector<128x128xbf16>, vector<128x128xf32> -> vector<128x128xf32>
    %66 = arith.addf %58, %65 : vector<128x128xf32>
    %c38_i32 = arith.constant 38 : i32
    %67 = arith.addi %1, %c38_i32 : i32
    %68 = arith.index_cast %67 : i32 to index
    %c0_32 = arith.constant 0 : index
    %69 = vector.load %arg2[%68, %c0_32] : memref<806x128xf32, #tpu.memory_space<vmem>>, vector<128x128xf32>
    %70 = arith.truncf %69 : vector<128x128xf32> to vector<128x128xbf16>
    %c8 = arith.constant 8 : index
    %c0_33 = arith.constant 0 : index
    %c0_34 = arith.constant 0 : index
    %71 = vector.load %arg3[%c8, %c0_33, %c0_34] : memref<9x128x128xbf16, #tpu.memory_space<vmem>>, vector<1x128x128xbf16>
    %72 = vector.shape_cast %71 : vector<1x128x128xbf16> to vector<128x128xbf16>
    %cst_35 = arith.constant dense<0.000000e+00> : vector<128x128xf32>
    %73 = tpu.matmul %70, %72, %cst_35 {dimension_numbers = #tpu.dot_dimension_numbers<[1], [0], [0], [1], [0, 0, 1, 1], [], []>} : vector<128x128xbf16>, vector<128x128xbf16>, vector<128x128xf32> -> vector<128x128xf32>
    %74 = arith.addf %66, %73 : vector<128x128xf32>
    %c0_36 = arith.constant 0 : index
    %c0_37 = arith.constant 0 : index
    %75 = vector.load %arg4[%c0_36, %c0_37] : memref<1x128xf32, #tpu.memory_space<vmem>>, vector<1x128xf32>
    %76 = vector.broadcast %75 : vector<1x128xf32> to vector<128x128xf32>
    %77 = arith.mulf %74, %76 : vector<128x128xf32>
    %c0_38 = arith.constant 0 : index
    %c0_39 = arith.constant 0 : index
    %78 = vector.load %arg5[%c0_38, %c0_39] : memref<1x128xf32, #tpu.memory_space<vmem>>, vector<1x128xf32>
    %79 = vector.broadcast %78 : vector<1x128xf32> to vector<128x128xf32>
    %80 = arith.addf %77, %79 : vector<128x128xf32>
    %cst_40 = arith.constant 0.000000e+00 : f32
    %81 = vector.broadcast %cst_40 : f32 to vector<128x128xf32>
    %82 = arith.maximumf %80, %81 : vector<128x128xf32>
    %c0_41 = arith.constant 0 : index
    %c0_42 = arith.constant 0 : index
    %83 = vector.load %arg6[%c0_41, %c0_42] : memref<128x128xf32, #tpu.memory_space<vmem>>, vector<128x128xf32>
    tpu.vector_store %arg6[%c0_41, %c0_42], %82 {strides = array<i32>} : memref<128x128xf32, #tpu.memory_space<vmem>>, vector<128x128xf32>,
    return
  }
  func.func @transform_0(%arg0: i32, %arg1: i32) -> (i32, i32) {
    %c0_i32 = arith.constant 0 : i32
    %c0_i32_0 = arith.constant 0 : i32
    %c0_i32_1 = arith.constant 0 : i32
    return %c0_i32, %c0_i32_0 : i32, i32
  }
  func.func @transform_1(%arg0: i32, %arg1: i32) -> (i32, i32, i32) {
    %c0_i32 = arith.constant 0 : i32
    %c0_i32_0 = arith.constant 0 : i32
    %c0_i32_1 = arith.constant 0 : i32
    return %arg1, %c0_i32, %c0_i32_0 : i32, i32, i32
  }
  func.func @transform_2(%arg0: i32, %arg1: i32) -> (i32, i32) {
    %c0_i32 = arith.constant 0 : i32
    %c0_i32_0 = arith.constant 0 : i32
    return %c0_i32, %arg1 : i32, i32
  }
  func.func @transform_3(%arg0: i32, %arg1: i32) -> (i32, i32) {
    %c0_i32 = arith.constant 0 : i32
    %c0_i32_0 = arith.constant 0 : i32
    return %c0_i32, %arg1 : i32, i32
  }
  func.func @transform_4(%arg0: i32, %arg1: i32) -> (i32, i32) {
    %c0_i32 = arith.constant 0 : i32
    return %arg0, %arg1 : i32, i32
  }
}

</mosaic_0001>

<llo_original>
// kernel: tpu_custom_call.1
$region0: #{tpu_custom_call.1}
  #allocation0 [shape = 'u32[]', space=smem, size = 0x4, offset = 0x4, fixed_abs, tag = 'smem constant byte address 0x4 - core index']
  #allocation1 [shape = 'u32[144,128]{1,0:T(1,128)}', space=vmem, size = 0x12000, scoped, tag = 'internal scratch']
  %s0 = inlined_call_operand.hbm [shape: f32[806,128], index: 0, kind: input, shape index: {}]
  %s1 = inlined_call_operand.hbm [shape: bf16[9,128,128], index: 1, kind: input, shape index: {}]
  %s2 = inlined_call_operand.vmem [shape: f32[1,128], index: 2, kind: input, shape index: {}]
  %s3 = inlined_call_operand.vmem [shape: f32[1,128], index: 3, kind: input, shape index: {}]
  %s4 = inlined_call_operand.hbm [shape: f32[768,128], index: 4, kind: output, shape index: {}]
  %s5 = sld [smem:[#allocation0]]
  $region57: #{tpu_custom_call.1} parent=0
    _
  %s7 = ssub.s32 1, %s5
  %s8 = scalar_select 0, %s7, %s5
  $region1: #{tpu_custom_call.1} parent=0
    #allocation2 [shape = 'u8[413696]{0}', space=vmem, size = 0x65000, scoped, tag = 'input window, operand 0, single buffered']
    #allocation3 [shape = 's32[2]{0}', space=sflag, size = 0x8, scoped, tag = 'scoped memory for tpu_custom_call.1']
    #allocation4 [shape = 's32[2]{0}', space=sflag, size = 0x8, scoped, tag = 'scoped memory for tpu_custom_call.1']
    #allocation5 [shape = 'u8[294912]{0}', space=vmem, size = 0x48000, scoped, tag = 'input window, operand 1, single buffered']
    #allocation6 [shape = 's32[1]{0}', space=sflag, size = 0x4, scoped, tag = 'scoped memory for tpu_custom_call.1']
    #allocation7 [shape = 'u8[131072]{0}', space=vmem, size = 0x20000, scoped, tag = 'output window, operand 0']
    %9 = vsyncpa [#allocation3], 0
    %10 = vsyncpa [#allocation6], 0
    %11 = vsyncpa [#allocation4], 0
    %s12 = scalar_lea.sflag [#allocation4], 1
    %13 = vsyncpa %s12, 0
    loop: start=0, step=1, limit=8
    $region2: #{tpu_custom_call.1} parent=1 // loop_pre_header
      _
    $region3: #{tpu_custom_call.1} parent=1 // loop_header
      %s15 = sphi 0, %s19
      %p16 = scmp.ge.s32.totalorder %s15, 8
      %s22 = sphi 0, %s34
      %s23 = sphi 0, %s30
      %s24 = sphi 0, %s22
      %s25 = sphi 0, %s23
      %s26 = sphi 0, %s24
      %s27 = sphi 0, %s25
      %s35 = sphi 0, %s35
      %s37 = sphi 0, %s35
      %s38 = sphi 0, %s37
      %s52 = sphi 0, %s38
      %s58 = sphi 0, %s60
      %s61 = sphi 0, %s58
      %s62 = sphi 0, %s61
      %s78 = sphi 0, %s62
      %s84 = sphi 0, %s86
      %s87 = sphi 0, %s84
      %s88 = sphi 0, %s87
      %s104 = sphi 0, %s88
      %s110 = sphi 0, %s112
      %s113 = sphi 0, %s110
      %s114 = sphi 0, %s113
      %s130 = sphi 0, %s114
      %s138 = sphi 0, %s140
      %s141 = sphi 0, %s138
      %s142 = sphi 0, %s141
      %s158 = sphi 0, %s142
    $region4: #{tpu_custom_call.1} parent=1 // loop_header_branch
      %18 = sbr.rel (%p16) target = $region8
    $region5: #{tpu_custom_call.1} parent=1 // loop_body
      %s20 = ssub.s32 %s15, 1
      %s21 = ssub.s32 %s15, 2
      %s28 = sadd.s32 1, %s23
      %p29 = scmp.ge.s32.totalorder %s28, 1
      %s30 = scalar_select %p29, 0, %s28
      %s31 = sadd.s32 1, %s22
      %s32 = scalar_select %p29, %s31, %s22
      %p33 = scmp.ge.s32.totalorder %s32, 6
      %s34 = scalar_select %p33, 0, %s32
      %s36 = sadd.s32 %s35, 1
      %p39 = scmp.eq.s32.totalorder %s15, 5
      %p40 = scmp.ne.s32.totalorder %s35, %s37
      %p41 = scmp.eq.s32.totalorder %s15, 0
      %p42 = por %p40, %p41
      %p43 = scmp.ne.s32.totalorder %s35, %s37
      %p44 = scmp.eq.s32.totalorder %s20, 5
      %p45 = por %p43, %p44
      %p46 = scmp.ne.s32.totalorder %s37, %s38
      %p47 = scmp.eq.s32.totalorder %s20, 0
      %p48 = por %p46, %p47
      %p49 = scmp.ne.s32.totalorder %s37, %s38
      %p50 = scmp.eq.s32.totalorder %s21, 5
      %p51 = por %p49, %p50
      %p53 = scmp.ne.s32.totalorder %s38, %s52
      %p54 = scmp.eq.s32.totalorder %s21, 0
      %p55 = por %p53, %p54
      %s56 = ssub.s32 %s23, %s30
      %p57 = scmp.eq.s32.totalorder %s56, 0
      %s59 = sadd.s32 %s58, 1
      %s60 = scalar_select %p57, %s58, %s59
      %p63 = pneg %p57
      %p64 = scmp.eq.s32.totalorder %s15, 5
      %p65 = por %p63, %p64
      %p66 = scmp.ne.s32.totalorder %s58, %s61
      %p67 = scmp.eq.s32.totalorder %s15, 0
      %p68 = por %p66, %p67
      %p69 = scmp.ne.s32.totalorder %s58, %s61
      %p70 = scmp.eq.s32.totalorder %s20, 5
      %p71 = por %p69, %p70
      %p72 = scmp.ne.s32.totalorder %s61, %s62
      %p73 = scmp.eq.s32.totalorder %s20, 0
      %p74 = por %p72, %p73
      %p75 = scmp.ne.s32.totalorder %s61, %s62
      %p76 = scmp.eq.s32.totalorder %s21, 5
      %p77 = por %p75, %p76
      %p79 = scmp.ne.s32.totalorder %s62, %s78
      %p80 = scmp.eq.s32.totalorder %s21, 0
      %p81 = por %p79, %p80
      %s82 = ssub.s32 %s23, %s30
      %p83 = scmp.eq.s32.totalorder %s82, 0
      %s85 = sadd.s32 %s84, 1
      %s86 = scalar_select %p83, %s84, %s85
      %p89 = pneg %p83
      %p90 = scmp.eq.s32.totalorder %s15, 5
      %p91 = por %p89, %p90
      %p92 = scmp.ne.s32.totalorder %s84, %s87
      %p93 = scmp.eq.s32.totalorder %s15, 0
      %p94 = por %p92, %p93
      %p95 = scmp.ne.s32.totalorder %s84, %s87
      %p96 = scmp.eq.s32.totalorder %s20, 5
      %p97 = por %p95, %p96
      %p98 = scmp.ne.s32.totalorder %s87, %s88
      %p99 = scmp.eq.s32.totalorder %s20, 0
      %p100 = por %p98, %p99
      %p101 = scmp.ne.s32.totalorder %s87, %s88
      %p102 = scmp.eq.s32.totalorder %s21, 5
      %p103 = por %p101, %p102
      %p105 = scmp.ne.s32.totalorder %s88, %s104
      %p106 = scmp.eq.s32.totalorder %s21, 0
      %p107 = por %p105, %p106
      %s108 = ssub.s32 %s23, %s30
      %p109 = scmp.eq.s32.totalorder %s108, 0
      %s111 = sadd.s32 %s110, 1
      %s112 = scalar_select %p109, %s110, %s111
      %p115 = pneg %p109
      %p116 = scmp.eq.s32.totalorder %s15, 5
      %p117 = por %p115, %p116
      %p118 = scmp.ne.s32.totalorder %s110, %s113
      %p119 = scmp.eq.s32.totalorder %s15, 0
      %p120 = por %p118, %p119
      %p121 = scmp.ne.s32.totalorder %s110, %s113
      %p122 = scmp.eq.s32.totalorder %s20, 5
      %p123 = por %p121, %p122
      %p124 = scmp.ne.s32.totalorder %s113, %s114
      %p125 = scmp.eq.s32.totalorder %s20, 0
      %p126 = por %p124, %p125
      %p127 = scmp.ne.s32.totalorder %s113, %s114
      %p128 = scmp.eq.s32.totalorder %s21, 5
      %p129 = por %p127, %p128
      %p131 = scmp.ne.s32.totalorder %s114, %s130
      %p132 = scmp.eq.s32.totalorder %s21, 0
      %p133 = por %p131, %p132
      %s134 = ssub.s32 %s22, %s34
      %s135 = ssub.s32 %s23, %s30
      %s136 = sor.u32 %s134, %s135
      %p137 = scmp.eq.s32.totalorder %s136, 0
      %s139 = sadd.s32 %s138, 1
      %s140 = scalar_select %p137, %s138, %s139
      %p143 = pneg %p137
      %p144 = scmp.eq.s32.totalorder %s15, 5
      %p145 = por %p143, %p144
      %p146 = scmp.ne.s32.totalorder %s138, %s141
      %p147 = scmp.eq.s32.totalorder %s15, 0
      %p148 = por %p146, %p147
      %p149 = scmp.ne.s32.totalorder %s138, %s141
      %p150 = scmp.eq.s32.totalorder %s20, 5
      %p151 = por %p149, %p150
      %p152 = scmp.ne.s32.totalorder %s141, %s142
      %p153 = scmp.eq.s32.totalorder %s20, 0
      %p154 = por %p152, %p153
      %p155 = scmp.ne.s32.totalorder %s141, %s142
      %p156 = scmp.eq.s32.totalorder %s21, 5
      %p157 = por %p155, %p156
      %p159 = scmp.ne.s32.totalorder %s142, %s158
      %p160 = scmp.eq.s32.totalorder %s21, 0
      %p161 = por %p159, %p160
      %p162 = scmp.le.s32.totalorder 1, %s15
      %p163 = scmp.lt.s32.totalorder %s15, 7
      %p164 = pnand %p162, %p163
      %p165 = pneg %p164
      // Predicated region
      $region9: #{tpu_custom_call.1} parent=5 // pred_check
        _
      $region10: #{tpu_custom_call.1} parent=5 // pred_check_branch
        %167 = sbr.rel (%p164) target = $region12
      $region11: #{tpu_custom_call.1} parent=5 // pred_region
        %s168 = ssub.s32 %s15, 1
        // Predicated region
        $region13: #{tpu_custom_call.1} parent=11 // pred_check
          %p169 = pneg %p48
        $region14: #{tpu_custom_call.1} parent=11 // pred_check_branch
          %171 = sbr.rel (%p169) target = $region16
        $region15: #{tpu_custom_call.1} parent=11 // pred_region
          %s173 = ssub.s32 12928, 12928
          %174 = vsyncadd [#allocation3], %s173
          %s175 = sshll.u32 [#allocation2], 4
          %s176 = int_to_ptr.vmem [resolvable:$true] %s175
          %181 = dma.hbm_to_vmem [thread:$0]  %s0, 12928, %s176, [#allocation3], 128, 128, 8
        $region16: #{tpu_custom_call.1} parent=11 // pred_fallthru
          _
        // Predicated region
        $region17: #{tpu_custom_call.1} parent=11 // pred_check
          %p182 = pneg %p74
        $region18: #{tpu_custom_call.1} parent=11 // pred_check_branch
          %184 = sbr.rel (%p182) target = $region20
        $region19: #{tpu_custom_call.1} parent=11 // pred_region
          %s185 = smul.u32 9, %s25
          %s187 = ssub.s32 9216, 9216
          %188 = vsyncadd [#allocation6], %s187
          %s189 = smul.addr %s185, 16
          %s190 = smul.addr %s189, 64
          %s191 = scalar_lea.hbm %s1, %s190
          %s192 = sshll.u32 [#allocation5], 4
          %s193 = int_to_ptr.vmem [resolvable:$true] %s192
          %198 = dma.hbm_to_vmem [thread:$0]  %s191, 9216, %s193, [#allocation6], 64, 64, 4
        $region20: #{tpu_custom_call.1} parent=11 // pred_fallthru
          _
        // Predicated region
        $region21: #{tpu_custom_call.1} parent=11 // pred_check
          %p199 = pneg %p100
        $region22: #{tpu_custom_call.1} parent=11 // pred_check_branch
          %201 = sbr.rel (%p199) target = $region24
        $region23: #{tpu_custom_call.1} parent=11 // pred_region
          %p202 = scmp.lt.s32.totalorder %s25, 0
          %s203 = scalar_select %p202, %s25, 0
          %s204 = scalar_lea.vmem %s2, %s203
        $region24: #{tpu_custom_call.1} parent=11 // pred_fallthru
          _
        // Predicated region
        $region25: #{tpu_custom_call.1} parent=11 // pred_check
          %p205 = pneg %p126
        $region26: #{tpu_custom_call.1} parent=11 // pred_check_branch
          %207 = sbr.rel (%p205) target = $region28
        $region27: #{tpu_custom_call.1} parent=11 // pred_region
          %p208 = scmp.lt.s32.totalorder %s25, 0
          %s209 = scalar_select %p208, %s25, 0
          %s210 = scalar_lea.vmem %s3, %s209
        $region28: #{tpu_custom_call.1} parent=11 // pred_fallthru
          _
      $region12: #{tpu_custom_call.1} parent=5 // pred_fallthru
        _
      %p211 = scmp.lt.s32.totalorder %s15, 6
      // Predicated region
      $region29: #{tpu_custom_call.1} parent=5 // pred_check
        %p212 = pneg %p211
      $region30: #{tpu_custom_call.1} parent=5 // pred_check_branch
        %214 = sbr.rel (%p212) target = $region32
      $region31: #{tpu_custom_call.1} parent=5 // pred_region
        _
      $region32: #{tpu_custom_call.1} parent=5 // pred_fallthru
        _
      %p215 = scmp.le.s32.totalorder 1, %s15
      %p216 = scmp.lt.s32.totalorder %s15, 7
      %p217 = pnand %p215, %p216
      %p218 = pneg %p217
      // Predicated region
      $region33: #{tpu_custom_call.1} parent=5 // pred_check
        _
      $region34: #{tpu_custom_call.1} parent=5 // pred_check_branch
        %220 = sbr.rel (%p217) target = $region36
      $region35: #{tpu_custom_call.1} parent=5 // pred_region
        %s221 = ssub.s32 %s15, 1
        // Predicated region
        $region37: #{tpu_custom_call.1} parent=35 // pred_check
          %p222 = pneg %p48
        $region38: #{tpu_custom_call.1} parent=35 // pred_check_branch
          %224 = sbr.rel (%p222) target = $region40
        $region39: #{tpu_custom_call.1} parent=35 // pred_region
          %225 = dma.done [#allocation3], 12928
        $region40: #{tpu_custom_call.1} parent=35 // pred_fallthru
          _
        // Predicated region
        $region41: #{tpu_custom_call.1} parent=35 // pred_check
          %p226 = pneg %p74
        $region42: #{tpu_custom_call.1} parent=35 // pred_check_branch
          %228 = sbr.rel (%p226) target = $region44
        $region43: #{tpu_custom_call.1} parent=35 // pred_region
          %229 = dma.done [#allocation6], 9216
        $region44: #{tpu_custom_call.1} parent=35 // pred_fallthru
          _
        %p230 = pneg %p48
        %p231 = pneg %p45
        %p232 = pneg %p74
        %p233 = pneg %p71
        %p234 = scmp.lt.s32.totalorder %s25, 0
        %s235 = scalar_select %p234, %s25, 0
        %s236 = scalar_lea.vmem %s2, %s235
        %p237 = pneg %p100
        %p238 = pneg %p97
        %p239 = scmp.lt.s32.totalorder %s25, 0
        %s240 = scalar_select %p239, %s25, 0
        %s241 = scalar_lea.vmem %s3, %s240
        %p242 = pneg %p126
        %p243 = pneg %p123
        %p244 = pneg %p154
        %p245 = pneg %p151
        %s246 = sand.u32 %s141, 1
        %s247 = scalar_lea.sflag [#allocation4], %s246
        %s248 = sand.u32 %s141, 1
        %s249 = smul.addr %s248, 128
        %s250 = scalar_lea.vmem [#allocation7], %s249
        %s251 = smul.u32 9, %s25
        %p252 = scmp.lt.s32.totalorder %s25, 0
        %s253 = scalar_select %p252, %s25, 0
        %s254 = scalar_lea.vmem %s2, %s253
        %p255 = scmp.lt.s32.totalorder %s25, 0
        %s256 = scalar_select %p255, %s25, 0
        %s257 = scalar_lea.vmem %s3, %s256
        %s258 = smul.u32 16, %s24
        %s260 = smul.u32 %s24, 128
        %s261 = scalar_lea.vmem [#allocation2], %s260
        %v262 = vld [vmem:[%s261] sm:$0xff]
        %v263 = vld [vmem:[%s261 + $0x8] sm:$0xff]
        %v264 = vld [vmem:[%s261 + $0x10] sm:$0xff]
        %v265 = vld [vmem:[%s261 + $0x18] sm:$0xff]
        %v266 = vld [vmem:[%s261 + $0x20] sm:$0xff]
        %v267 = vld [vmem:[%s261 + $0x28] sm:$0xff]
        %v268 = vld [vmem:[%s261 + $0x30] sm:$0xff]
        %v269 = vld [vmem:[%s261 + $0x38] sm:$0xff]
        %v270 = vld [vmem:[%s261 + $0x40] sm:$0xff]
        %v271 = vld [vmem:[%s261 + $0x48] sm:$0xff]
        %v272 = vld [vmem:[%s261 + $0x50] sm:$0xff]
        %v273 = vld [vmem:[%s261 + $0x58] sm:$0xff]
        %v274 = vld [vmem:[%s261 + $0x60] sm:$0xff]
        %v275 = vld [vmem:[%s261 + $0x68] sm:$0xff]
        %v276 = vld [vmem:[%s261 + $0x70] sm:$0xff]
        %v277 = vld [vmem:[%s261 + $0x78] sm:$0xff]
        %v278 = vpack.c.bf16 %v263, %v262
        %v279 = vpack.c.bf16 %v265, %v264
        %v280 = vpack.c.bf16 %v267, %v266
        %v281 = vpack.c.bf16 %v269, %v268
        %v282 = vpack.c.bf16 %v271, %v270
        %v283 = vpack.c.bf16 %v273, %v272
        %v284 = vpack.c.bf16 %v275, %v274
        %v285 = vpack.c.bf16 %v277, %v276
        %v286 = vld [vmem:[#allocation5] sm:$0xf]
        %v287 = vld [vmem:[#allocation5 + $0x4] sm:$0xf]
        %v288 = vld [vmem:[#allocation5 + $0x8] sm:$0xf]
        %v289 = vld [vmem:[#allocation5 + $0xc] sm:$0xf]
        %v290 = vld [vmem:[#allocation5 + $0x10] sm:$0xf]
        %v291 = vld [vmem:[#allocation5 + $0x14] sm:$0xf]
        %v292 = vld [vmem:[#allocation5 + $0x18] sm:$0xf]
        %v293 = vld [vmem:[#allocation5 + $0x1c] sm:$0xf]
        %v294 = vld [vmem:[#allocation5 + $0x20] sm:$0xf]
        %v295 = vld [vmem:[#allocation5 + $0x24] sm:$0xf]
        %v296 = vld [vmem:[#allocation5 + $0x28] sm:$0xf]
        %v297 = vld [vmem:[#allocation5 + $0x2c] sm:$0xf]
        %v298 = vld [vmem:[#allocation5 + $0x30] sm:$0xf]
        %v299 = vld [vmem:[#allocation5 + $0x34] sm:$0xf]
        %v300 = vld [vmem:[#allocation5 + $0x38] sm:$0xf]
        %v301 = vld [vmem:[#allocation5 + $0x3c] sm:$0xf]
        %s302 = sadd.s32 %s260, 1
        %s303 = scalar_lea.vmem [#allocation2], %s302
        %v304 = vld [vmem:[%s303] sm:$0xff]
        %v305 = vld [vmem:[%s303 + $0x8] sm:$0xff]
        %v306 = vld [vmem:[%s303 + $0x10] sm:$0xff]
        %v307 = vld [vmem:[%s303 + $0x18] sm:$0xff]
        %v308 = vld [vmem:[%s303 + $0x20] sm:$0xff]
        %v309 = vld [vmem:[%s303 + $0x28] sm:$0xff]
        %v310 = vld [vmem:[%s303 + $0x30] sm:$0xff]
        %v311 = vld [vmem:[%s303 + $0x38] sm:$0xff]
        %v312 = vld [vmem:[%s303 + $0x40] sm:$0xff]
        %v313 = vld [vmem:[%s303 + $0x48] sm:$0xff]
        %v314 = vld [vmem:[%s303 + $0x50] sm:$0xff]
        %v315 = vld [vmem:[%s303 + $0x58] sm:$0xff]
        %v316 = vld [vmem:[%s303 + $0x60] sm:$0xff]
        %v317 = vld [vmem:[%s303 + $0x68] sm:$0xff]
        %v318 = vld [vmem:[%s303 + $0x70] sm:$0xff]
        %v319 = vld [vmem:[%s303 + $0x78] sm:$0xff]
        %v320 = vpack.c.bf16 %v305, %v304
        %v321 = vpack.c.bf16 %v307, %v306
        %v322 = vpack.c.bf16 %v309, %v308
        %v323 = vpack.c.bf16 %v311, %v310
        %v324 = vpack.c.bf16 %v313, %v312
        %v325 = vpack.c.bf16 %v315, %v314
        %v326 = vpack.c.bf16 %v317, %v316
        %v327 = vpack.c.bf16 %v319, %v318
        %s328 = scalar_lea.vmem [#allocation5], 64
        %v329 = vld [vmem:[%s328] sm:$0xf]
        %v330 = vld [vmem:[%s328 + $0x4] sm:$0xf]
        %v331 = vld [vmem:[%s328 + $0x8] sm:$0xf]
        %v332 = vld [vmem:[%s328 + $0xc] sm:$0xf]
        %v333 = vld [vmem:[%s328 + $0x10] sm:$0xf]
        %v334 = vld [vmem:[%s328 + $0x14] sm:$0xf]
        %v335 = vld [vmem:[%s328 + $0x18] sm:$0xf]
        %v336 = vld [vmem:[%s328 + $0x1c] sm:$0xf]
        %v337 = vld [vmem:[%s328 + $0x20] sm:$0xf]
        %v338 = vld [vmem:[%s328 + $0x24] sm:$0xf]
        %v339 = vld [vmem:[%s328 + $0x28] sm:$0xf]
        %v340 = vld [vmem:[%s328 + $0x2c] sm:$0xf]
        %v341 = vld [vmem:[%s328 + $0x30] sm:$0xf]
        %v342 = vld [vmem:[%s328 + $0x34] sm:$0xf]
        %v343 = vld [vmem:[%s328 + $0x38] sm:$0xf]
        %v344 = vld [vmem:[%s328 + $0x3c] sm:$0xf]
        %v361 = vunpack.c.l.b16 %v329
        %v362 = vunpack.c.l.b16 %v330
        %v363 = vunpack.c.l.b16 %v331
        %v364 = vunpack.c.l.b16 %v332
        %v365 = vunpack.c.l.b16 %v333
        %v366 = vunpack.c.l.b16 %v334
        %v367 = vunpack.c.l.b16 %v335
        %v368 = vunpack.c.l.b16 %v336
        %v369 = vunpack.c.l.b16 %v337
        %v370 = vunpack.c.l.b16 %v338
        %v371 = vunpack.c.l.b16 %v339
        %v372 = vunpack.c.l.b16 %v340
        %v373 = vunpack.c.l.b16 %v341
        %v374 = vunpack.c.l.b16 %v342
        %v375 = vunpack.c.l.b16 %v343
        %v376 = vunpack.c.l.b16 %v344
        %v377 = vpack.c.b16 %v362, %v361
        %v378 = vpack.c.b16 %v364, %v363
        %v379 = vpack.c.b16 %v366, %v365
        %v380 = vpack.c.b16 %v368, %v367
        %v381 = vpack.c.b16 %v370, %v369
        %v382 = vpack.c.b16 %v372, %v371
        %v383 = vpack.c.b16 %v374, %v373
        %v384 = vpack.c.b16 %v376, %v375
        %393 = vmatprep.subr.bf16.mxu0 0
        %394 = vmatpush1.bf16.msra.mxu0 %v377
        %395 = vmatprep.subr.bf16.mxu0 0
        %396 = vmatpush1.bf16.msra.mxu0 %v378
        %397 = vmatprep.subr.bf16.mxu0 0
        %398 = vmatpush1.bf16.msra.mxu0 %v379
        %399 = vmatprep.subr.bf16.mxu0 0
        %400 = vmatpush1.bf16.msra.mxu0 %v380
        %401 = vmatprep.subr.bf16.mxu0 0
        %402 = vmatpush1.bf16.msra.mxu0 %v381
        %403 = vmatprep.subr.bf16.mxu0 0
        %404 = vmatpush1.bf16.msra.mxu0 %v382
        %405 = vmatprep.subr.bf16.mxu0 0
        %406 = vmatpush1.bf16.msra.mxu0 %v383
        %407 = vmatprep.subr.bf16.mxu0 0
        %408 = vmatpush1.bf16.msra.mxu0 %v384
        %409 = vmatprep.subr.bf16.mxu0 0
        %410 = vmatpush1.bf16.msra.mxu0 0
        %411 = vmatprep.subr.bf16.mxu0 0
        %412 = vmatpush1.bf16.msra.mxu0 0
        %413 = vmatprep.subr.bf16.mxu0 0
        %414 = vmatpush1.bf16.msra.mxu0 0
        %415 = vmatprep.subr.bf16.mxu0 0
        %416 = vmatpush1.bf16.msra.mxu0 0
        %417 = vmatprep.subr.bf16.mxu0 0
        %418 = vmatpush1.bf16.msra.mxu0 0
        %419 = vmatprep.subr.bf16.mxu0 0
        %420 = vmatpush1.bf16.msra.mxu0 0
        %421 = vmatprep.subr.bf16.mxu0 0
        %422 = vmatpush1.bf16.msra.mxu0 0
        %423 = vmatprep.subr.bf16.mxu0 0
        %424 = vmatpush1.bf16.msra.mxu0 0
        %425 = vmatprep.mubr.bf16.mxu0 0
        %426 = vmatmul.mubr.bf16.gmra.mrb[0].mxu0 %v320
        %v427 = vpop.f32.mrb[0].mxu0
        %v428 = vadd.f32 0.0, %v427
        %v429 = vpop.f32.mrb[0].mxu0
        %v430 = vpop.f32.mrb[0].mxu0
        %v431 = vadd.f32 0.0, %v430
        %v432 = vpop.f32.mrb[0].mxu0
        %433 = vmatprep.mubr.bf16.mxu0 0
        %434 = vmatmul.mubr.bf16.gmra.mrb[0].mxu0 %v321
        %v435 = vpop.f32.mrb[0].mxu0
        %v436 = vadd.f32 0.0, %v435
        %v437 = vpop.f32.mrb[0].mxu0
        %v438 = vpop.f32.mrb[0].mxu0
        %v439 = vadd.f32 0.0, %v438
        %v440 = vpop.f32.mrb[0].mxu0
        %441 = vmatprep.mubr.bf16.mxu0 0
        %442 = vmatmul.mubr.bf16.gmra.mrb[0].mxu0 %v322
        %v443 = vpop.f32.mrb[0].mxu0
        %v444 = vadd.f32 0.0, %v443
        %v445 = vpop.f32.mrb[0].mxu0
        %v446 = vpop.f32.mrb[0].mxu0
        %v447 = vadd.f32 0.0, %v446
        %v448 = vpop.f32.mrb[0].mxu0
        %449 = vmatprep.mubr.bf16.mxu0 0
        %450 = vmatmul.mubr.bf16.gmra.mrb[0].mxu0 %v323
        %v451 = vpop.f32.mrb[0].mxu0
        %v452 = vadd.f32 0.0, %v451
        %v453 = vpop.f32.mrb[0].mxu0
        %v454 = vpop.f32.mrb[0].mxu0
        %v455 = vadd.f32 0.0, %v454
        %v456 = vpop.f32.mrb[0].mxu0
        %457 = vmatprep.mubr.bf16.mxu0 0
        %458 = vmatmul.mubr.bf16.gmra.mrb[0].mxu0 %v324
        %v459 = vpop.f32.mrb[0].mxu0
        %v460 = vadd.f32 0.0, %v459
        %v461 = vpop.f32.mrb[0].mxu0
        %v462 = vpop.f32.mrb[0].mxu0
        %v463 = vadd.f32 0.0, %v462
        %v464 = vpop.f32.mrb[0].mxu0
        %465 = vmatprep.mubr.bf16.mxu0 0
        %466 = vmatmul.mubr.bf16.gmra.mrb[0].mxu0 %v325
        %v467 = vpop.f32.mrb[0].mxu0
        %v468 = vadd.f32 0.0, %v467
        %v469 = vpop.f32.mrb[0].mxu0
        %v470 = vpop.f32.mrb[0].mxu0
        %v471 = vadd.f32 0.0, %v470
        %v472 = vpop.f32.mrb[0].mxu0
        %473 = vmatprep.mubr.bf16.mxu0 0
        %474 = vmatmul.mubr.bf16.gmra.mrb[0].mxu0 %v326
        %v475 = vpop.f32.mrb[0].mxu0
        %v476 = vadd.f32 0.0, %v475
        %v477 = vpop.f32.mrb[0].mxu0
        %v478 = vpop.f32.mrb[0].mxu0
        %v479 = vadd.f32 0.0, %v478
        %v480 = vpop.f32.mrb[0].mxu0
        %481 = vmatprep.mubr.bf16.mxu0 0
        %482 = vmatmul.mubr.bf16.gmra.mrb[0].mxu0 %v327
        %v483 = vpop.f32.mrb[0].mxu0
        %v484 = vadd.f32 0.0, %v483
        %v485 = vpop.f32.mrb[0].mxu0
        %v486 = vpop.f32.mrb[0].mxu0
        %v487 = vadd.f32 0.0, %v486
        %v488 = vpop.f32.mrb[0].mxu0
        %489 = vdwg.mxu0
        %v506 = vunpack.c.l.b16 %v286
        %v507 = vunpack.c.l.b16 %v287
        %v508 = vunpack.c.l.b16 %v288
        %v509 = vunpack.c.l.b16 %v289
        %v510 = vunpack.c.l.b16 %v290
        %v511 = vunpack.c.l.b16 %v291
        %v512 = vunpack.c.l.b16 %v292
        %v513 = vunpack.c.l.b16 %v293
        %v514 = vunpack.c.l.b16 %v294
        %v515 = vunpack.c.l.b16 %v295
        %v516 = vunpack.c.l.b16 %v296
        %v517 = vunpack.c.l.b16 %v297
        %v518 = vunpack.c.l.b16 %v298
        %v519 = vunpack.c.l.b16 %v299
        %v520 = vunpack.c.l.b16 %v300
        %v521 = vunpack.c.l.b16 %v301
        %v522 = vpack.c.b16 %v507, %v506
        %v523 = vpack.c.b16 %v509, %v508
        %v524 = vpack.c.b16 %v511, %v510
        %v525 = vpack.c.b16 %v513, %v512
        %v526 = vpack.c.b16 %v515, %v514
        %v527 = vpack.c.b16 %v517, %v516
        %v528 = vpack.c.b16 %v519, %v518
        %v529 = vpack.c.b16 %v521, %v520
        %538 = vmatprep.subr.bf16.mxu0 0
        %539 = vmatpush1.bf16.msra.mxu0 %v522
        %540 = vmatprep.subr.bf16.mxu0 0
        %541 = vmatpush1.bf16.msra.mxu0 %v523
        %542 = vmatprep.subr.bf16.mxu0 0
        %543 = vmatpush1.bf16.msra.mxu0 %v524
        %544 = vmatprep.subr.bf16.mxu0 0
        %545 = vmatpush1.bf16.msra.mxu0 %v525
        %546 = vmatprep.subr.bf16.mxu0 0
        %547 = vmatpush1.bf16.msra.mxu0 %v526
        %548 = vmatprep.subr.bf16.mxu0 0
        %549 = vmatpush1.bf16.msra.mxu0 %v527
        %550 = vmatprep.subr.bf16.mxu0 0
        %551 = vmatpush1.bf16.msra.mxu0 %v528
        %552 = vmatprep.subr.bf16.mxu0 0
        %553 = vmatpush1.bf16.msra.mxu0 %v529
        %554 = vmatprep.subr.bf16.mxu0 0
        %555 = vmatpush1.bf16.msra.mxu0 0
        %556 = vmatprep.subr.bf16.mxu0 0
        %557 = vmatpush1.bf16.msra.mxu0 0
        %558 = vmatprep.subr.bf16.mxu0 0
        %559 = vmatpush1.bf16.msra.mxu0 0
        %560 = vmatprep.subr.bf16.mxu0 0
        %561 = vmatpush1.bf16.msra.mxu0 0
        %562 = vmatprep.subr.bf16.mxu0 0
        %563 = vmatpush1.bf16.msra.mxu0 0
        %564 = vmatprep.subr.bf16.mxu0 0
        %565 = vmatpush1.bf16.msra.mxu0 0
        %566 = vmatprep.subr.bf16.mxu0 0
        %567 = vmatpush1.bf16.msra.mxu0 0
        %568 = vmatprep.subr.bf16.mxu0 0
        %569 = vmatpush1.bf16.msra.mxu0 0
        %570 = vmatprep.mubr.bf16.mxu0 0
        %571 = vmatmul.mubr.bf16.gmra.mrb[0].mxu0 %v278
        %v572 = vpop.f32.mrb[0].mxu0
        %v573 = vadd.f32 %v428, %v572
        %v574 = vpop.f32.mrb[0].mxu0
        %v575 = vpop.f32.mrb[0].mxu0
        %v576 = vadd.f32 %v431, %v575
        %v577 = vpop.f32.mrb[0].mxu0
        %578 = vmatprep.mubr.bf16.mxu0 0
        %579 = vmatmul.mubr.bf16.gmra.mrb[0].mxu0 %v279
        %v580 = vpop.f32.mrb[0].mxu0
        %v581 = vadd.f32 %v436, %v580
        %v582 = vpop.f32.mrb[0].mxu0
        %v583 = vpop.f32.mrb[0].mxu0
        %v584 = vadd.f32 %v439, %v583
        %v585 = vpop.f32.mrb[0].mxu0
        %586 = vmatprep.mubr.bf16.mxu0 0
        %587 = vmatmul.mubr.bf16.gmra.mrb[0].mxu0 %v280
        %v588 = vpop.f32.mrb[0].mxu0
        %v589 = vadd.f32 %v444, %v588
        %v590 = vpop.f32.mrb[0].mxu0
        %v591 = vpop.f32.mrb[0].mxu0
        %v592 = vadd.f32 %v447, %v591
        %v593 = vpop.f32.mrb[0].mxu0
        %594 = vmatprep.mubr.bf16.mxu0 0
        %595 = vmatmul.mubr.bf16.gmra.mrb[0].mxu0 %v281
        %v596 = vpop.f32.mrb[0].mxu0
        %v597 = vadd.f32 %v452, %v596
        %v598 = vpop.f32.mrb[0].mxu0
        %v599 = vpop.f32.mrb[0].mxu0
        %v600 = vadd.f32 %v455, %v599
        %v601 = vpop.f32.mrb[0].mxu0
        %602 = vmatprep.mubr.bf16.mxu0 0
        %603 = vmatmul.mubr.bf16.gmra.mrb[0].mxu0 %v282
        %v604 = vpop.f32.mrb[0].mxu0
        %v605 = vadd.f32 %v460, %v604
        %v606 = vpop.f32.mrb[0].mxu0
        %v607 = vpop.f32.mrb[0].mxu0
        %v608 = vadd.f32 %v463, %v607
        %v609 = vpop.f32.mrb[0].mxu0
        %610 = vmatprep.mubr.bf16.mxu0 0
        %611 = vmatmul.mubr.bf16.gmra.mrb[0].mxu0 %v283
        %v612 = vpop.f32.mrb[0].mxu0
        %v613 = vadd.f32 %v468, %v612
        %v614 = vpop.f32.mrb[0].mxu0
        %v615 = vpop.f32.mrb[0].mxu0
        %v616 = vadd.f32 %v471, %v615
        %v617 = vpop.f32.mrb[0].mxu0
        %618 = vmatprep.mubr.bf16.mxu0 0
        %619 = vmatmul.mubr.bf16.gmra.mrb[0].mxu0 %v284
        %v620 = vpop.f32.mrb[0].mxu0
        %v621 = vadd.f32 %v476, %v620
        %v622 = vpop.f32.mrb[0].mxu0
        %v623 = vpop.f32.mrb[0].mxu0
        %v624 = vadd.f32 %v479, %v623
        %v625 = vpop.f32.mrb[0].mxu0
        %626 = vmatprep.mubr.bf16.mxu0 0
        %627 = vmatmul.mubr.bf16.gmra.mrb[0].mxu0 %v285
        %v628 = vpop.f32.mrb[0].mxu0
        %v629 = vadd.f32 %v484, %v628
        %v630 = vpop.f32.mrb[0].mxu0
        %v631 = vpop.f32.mrb[0].mxu0
        %v632 = vadd.f32 %v487, %v631
        %v633 = vpop.f32.mrb[0].mxu0
        %634 = vdwg.mxu0
        %s635 = sadd.s32 %s260, 2
        %s636 = scalar_lea.vmem [#allocation2], %s635
        %v637 = vld [vmem:[%s636] sm:$0xff]
        %v638 = vld [vmem:[%s636 + $0x8] sm:$0xff]
        %v639 = vld [vmem:[%s636 + $0x10] sm:$0xff]
        %v640 = vld [vmem:[%s636 + $0x18] sm:$0xff]
        %v641 = vld [vmem:[%s636 + $0x20] sm:$0xff]
        %v642 = vld [vmem:[%s636 + $0x28] sm:$0xff]
        %v643 = vld [vmem:[%s636 + $0x30] sm:$0xff]
        %v644 = vld [vmem:[%s636 + $0x38] sm:$0xff]
        %v645 = vld [vmem:[%s636 + $0x40] sm:$0xff]
        %v646 = vld [vmem:[%s636 + $0x48] sm:$0xff]
        %v647 = vld [vmem:[%s636 + $0x50] sm:$0xff]
        %v648 = vld [vmem:[%s636 + $0x58] sm:$0xff]
        %v649 = vld [vmem:[%s636 + $0x60] sm:$0xff]
        %v650 = vld [vmem:[%s636 + $0x68] sm:$0xff]
        %v651 = vld [vmem:[%s636 + $0x70] sm:$0xff]
        %v652 = vld [vmem:[%s636 + $0x78] sm:$0xff]
        %v653 = vpack.c.bf16 %v638, %v637
        %v654 = vpack.c.bf16 %v640, %v639
        %v655 = vpack.c.bf16 %v642, %v641
        %v656 = vpack.c.bf16 %v644, %v643
        %v657 = vpack.c.bf16 %v646, %v645
        %v658 = vpack.c.bf16 %v648, %v647
        %v659 = vpack.c.bf16 %v650, %v649
        %v660 = vpack.c.bf16 %v652, %v651
        %s661 = scalar_lea.vmem [#allocation5], 128
        %v662 = vld [vmem:[%s661] sm:$0xf]
        %v663 = vld [vmem:[%s661 + $0x4] sm:$0xf]
        %v664 = vld [vmem:[%s661 + $0x8] sm:$0xf]
        %v665 = vld [vmem:[%s661 + $0xc] sm:$0xf]
        %v666 = vld [vmem:[%s661 + $0x10] sm:$0xf]
        %v667 = vld [vmem:[%s661 + $0x14] sm:$0xf]
        %v668 = vld [vmem:[%s661 + $0x18] sm:$0xf]
        %v669 = vld [vmem:[%s661 + $0x1c] sm:$0xf]
        %v670 = vld [vmem:[%s661 + $0x20] sm:$0xf]
        %v671 = vld [vmem:[%s661 + $0x24] sm:$0xf]
        %v672 = vld [vmem:[%s661 + $0x28] sm:$0xf]
        %v673 = vld [vmem:[%s661 + $0x2c] sm:$0xf]
        %v674 = vld [vmem:[%s661 + $0x30] sm:$0xf]
        %v675 = vld [vmem:[%s661 + $0x34] sm:$0xf]
        %v676 = vld [vmem:[%s661 + $0x38] sm:$0xf]
        %v677 = vld [vmem:[%s661 + $0x3c] sm:$0xf]
        %v694 = vunpack.c.l.b16 %v662
        %v695 = vunpack.c.l.b16 %v663
        %v696 = vunpack.c.l.b16 %v664
        %v697 = vunpack.c.l.b16 %v665
        %v698 = vunpack.c.l.b16 %v666
        %v699 = vunpack.c.l.b16 %v667
        %v700 = vunpack.c.l.b16 %v668
        %v701 = vunpack.c.l.b16 %v669
        %v702 = vunpack.c.l.b16 %v670
        %v703 = vunpack.c.l.b16 %v671
        %v704 = vunpack.c.l.b16 %v672
        %v705 = vunpack.c.l.b16 %v673
        %v706 = vunpack.c.l.b16 %v674
        %v707 = vunpack.c.l.b16 %v675
        %v708 = vunpack.c.l.b16 %v676
        %v709 = vunpack.c.l.b16 %v677
        %v710 = vpack.c.b16 %v695, %v694
        %v711 = vpack.c.b16 %v697, %v696
        %v712 = vpack.c.b16 %v699, %v698
        %v713 = vpack.c.b16 %v701, %v700
        %v714 = vpack.c.b16 %v703, %v702
        %v715 = vpack.c.b16 %v705, %v704
        %v716 = vpack.c.b16 %v707, %v706
        %v717 = vpack.c.b16 %v709, %v708
        %726 = vmatprep.subr.bf16.mxu0 0
        %727 = vmatpush1.bf16.msra.mxu0 %v710
        %728 = vmatprep.subr.bf16.mxu0 0
        %729 = vmatpush1.bf16.msra.mxu0 %v711
        %730 = vmatprep.subr.bf16.mxu0 0
        %731 = vmatpush1.bf16.msra.mxu0 %v712
        %732 = vmatprep.subr.bf16.mxu0 0
        %733 = vmatpush1.bf16.msra.mxu0 %v713
        %734 = vmatprep.subr.bf16.mxu0 0
        %735 = vmatpush1.bf16.msra.mxu0 %v714
        %736 = vmatprep.subr.bf16.mxu0 0
        %737 = vmatpush1.bf16.msra.mxu0 %v715
        %738 = vmatprep.subr.bf16.mxu0 0
        %739 = vmatpush1.bf16.msra.mxu0 %v716
        %740 = vmatprep.subr.bf16.mxu0 0
        %741 = vmatpush1.bf16.msra.mxu0 %v717
        %742 = vmatprep.subr.bf16.mxu0 0
        %743 = vmatpush1.bf16.msra.mxu0 0
        %744 = vmatprep.subr.bf16.mxu0 0
        %745 = vmatpush1.bf16.msra.mxu0 0
        %746 = vmatprep.subr.bf16.mxu0 0
        %747 = vmatpush1.bf16.msra.mxu0 0
        %748 = vmatprep.subr.bf16.mxu0 0
        %749 = vmatpush1.bf16.msra.mxu0 0
        %750 = vmatprep.subr.bf16.mxu0 0
        %751 = vmatpush1.bf16.msra.mxu0 0
        %752 = vmatprep.subr.bf16.mxu0 0
        %753 = vmatpush1.bf16.msra.mxu0 0
        %754 = vmatprep.subr.bf16.mxu0 0
        %755 = vmatpush1.bf16.msra.mxu0 0
        %756 = vmatprep.subr.bf16.mxu0 0
        %757 = vmatpush1.bf16.msra.mxu0 0
        %758 = vmatprep.mubr.bf16.mxu0 0
        %759 = vmatmul.mubr.bf16.gmra.mrb[0].mxu0 %v653
        %v760 = vpop.f32.mrb[0].mxu0
        %v761 = vadd.f32 0.0, %v760
        %v762 = vpop.f32.mrb[0].mxu0
        %v763 = vpop.f32.mrb[0].mxu0
        %v764 = vadd.f32 0.0, %v763
        %v765 = vpop.f32.mrb[0].mxu0
        %766 = vmatprep.mubr.bf16.mxu0 0
        %767 = vmatmul.mubr.bf16.gmra.mrb[0].mxu0 %v654
        %v768 = vpop.f32.mrb[0].mxu0
        %v769 = vadd.f32 0.0, %v768
        %v770 = vpop.f32.mrb[0].mxu0
        %v771 = vpop.f32.mrb[0].mxu0
        %v772 = vadd.f32 0.0, %v771
        %v773 = vpop.f32.mrb[0].mxu0
        %774 = vmatprep.mubr.bf16.mxu0 0
        %775 = vmatmul.mubr.bf16.gmra.mrb[0].mxu0 %v655
        %v776 = vpop.f32.mrb[0].mxu0
        %v777 = vadd.f32 0.0, %v776
        %v778 = vpop.f32.mrb[0].mxu0
        %v779 = vpop.f32.mrb[0].mxu0
        %v780 = vadd.f32 0.0, %v779
        %v781 = vpop.f32.mrb[0].mxu0
        %782 = vmatprep.mubr.bf16.mxu0 0
        %783 = vmatmul.mubr.bf16.gmra.mrb[0].mxu0 %v656
        %v784 = vpop.f32.mrb[0].mxu0
        %v785 = vadd.f32 0.0, %v784
        %v786 = vpop.f32.mrb[0].mxu0
        %v787 = vpop.f32.mrb[0].mxu0
        %v788 = vadd.f32 0.0, %v787
        %v789 = vpop.f32.mrb[0].mxu0
        %790 = vmatprep.mubr.bf16.mxu0 0
        %791 = vmatmul.mubr.bf16.gmra.mrb[0].mxu0 %v657
        %v792 = vpop.f32.mrb[0].mxu0
        %v793 = vadd.f32 0.0, %v792
        %v794 = vpop.f32.mrb[0].mxu0
        %v795 = vpop.f32.mrb[0].mxu0
        %v796 = vadd.f32 0.0, %v795
        %v797 = vpop.f32.mrb[0].mxu0
        %798 = vmatprep.mubr.bf16.mxu0 0
        %799 = vmatmul.mubr.bf16.gmra.mrb[0].mxu0 %v658
        %v800 = vpop.f32.mrb[0].mxu0
        %v801 = vadd.f32 0.0, %v800
        %v802 = vpop.f32.mrb[0].mxu0
        %v803 = vpop.f32.mrb[0].mxu0
        %v804 = vadd.f32 0.0, %v803
        %v805 = vpop.f32.mrb[0].mxu0
        %806 = vmatprep.mubr.bf16.mxu0 0
        %807 = vmatmul.mubr.bf16.gmra.mrb[0].mxu0 %v659
        %v808 = vpop.f32.mrb[0].mxu0
        %v809 = vadd.f32 0.0, %v808
        %v810 = vpop.f32.mrb[0].mxu0
        %v811 = vpop.f32.mrb[0].mxu0
        %v812 = vadd.f32 0.0, %v811
        %v813 = vpop.f32.mrb[0].mxu0
        %814 = vmatprep.mubr.bf16.mxu0 0
        %815 = vmatmul.mubr.bf16.gmra.mrb[0].mxu0 %v660
        %v816 = vpop.f32.mrb[0].mxu0
        %v817 = vadd.f32 0.0, %v816
        %v818 = vpop.f32.mrb[0].mxu0
        %v819 = vpop.f32.mrb[0].mxu0
        %v820 = vadd.f32 0.0, %v819
        %v821 = vpop.f32.mrb[0].mxu0
        %822 = vdwg.mxu0
        %v823 = vadd.f32 %v573, %v761
        %v824 = vadd.f32 %v576, %v764
        %v825 = vadd.f32 %v581, %v769
        %v826 = vadd.f32 %v584, %v772
        %v827 = vadd.f32 %v589, %v777
        %v828 = vadd.f32 %v592, %v780
        %v829 = vadd.f32 %v597, %v785
        %v830 = vadd.f32 %v600, %v788
        %v831 = vadd.f32 %v605, %v793
        %v832 = vadd.f32 %v608, %v796
        %v833 = vadd.f32 %v613, %v801
        %v834 = vadd.f32 %v616, %v804
        %v835 = vadd.f32 %v621, %v809
        %v836 = vadd.f32 %v624, %v812
        %v837 = vadd.f32 %v629, %v817
        %v838 = vadd.f32 %v632, %v820
        %s839 = sadd.s32 %s260, 18
        %s840 = scalar_lea.vmem [#allocation2], %s839
        %v841 = vld [vmem:[%s840] sm:$0xff]
        %v842 = vld [vmem:[%s840 + $0x8] sm:$0xff]
        %v843 = vld [vmem:[%s840 + $0x10] sm:$0xff]
        %v844 = vld [vmem:[%s840 + $0x18] sm:$0xff]
        %v845 = vld [vmem:[%s840 + $0x20] sm:$0xff]
        %v846 = vld [vmem:[%s840 + $0x28] sm:$0xff]
        %v847 = vld [vmem:[%s840 + $0x30] sm:$0xff]
        %v848 = vld [vmem:[%s840 + $0x38] sm:$0xff]
        %v849 = vld [vmem:[%s840 + $0x40] sm:$0xff]
        %v850 = vld [vmem:[%s840 + $0x48] sm:$0xff]
        %v851 = vld [vmem:[%s840 + $0x50] sm:$0xff]
        %v852 = vld [vmem:[%s840 + $0x58] sm:$0xff]
        %v853 = vld [vmem:[%s840 + $0x60] sm:$0xff]
        %v854 = vld [vmem:[%s840 + $0x68] sm:$0xff]
        %v855 = vld [vmem:[%s840 + $0x70] sm:$0xff]
        %v856 = vld [vmem:[%s840 + $0x78] sm:$0xff]
        %v857 = vpack.c.bf16 %v842, %v841
        %v858 = vpack.c.bf16 %v844, %v843
        %v859 = vpack.c.bf16 %v846, %v845
        %v860 = vpack.c.bf16 %v848, %v847
        %v861 = vpack.c.bf16 %v850, %v849
        %v862 = vpack.c.bf16 %v852, %v851
        %v863 = vpack.c.bf16 %v854, %v853
        %v864 = vpack.c.bf16 %v856, %v855
        %s865 = scalar_lea.vmem [#allocation5], 192
        %v866 = vld [vmem:[%s865] sm:$0xf]
        %v867 = vld [vmem:[%s865 + $0x4] sm:$0xf]
        %v868 = vld [vmem:[%s865 + $0x8] sm:$0xf]
        %v869 = vld [vmem:[%s865 + $0xc] sm:$0xf]
        %v870 = vld [vmem:[%s865 + $0x10] sm:$0xf]
        %v871 = vld [vmem:[%s865 + $0x14] sm:$0xf]
        %v872 = vld [vmem:[%s865 + $0x18] sm:$0xf]
        %v873 = vld [vmem:[%s865 + $0x1c] sm:$0xf]
        %v874 = vld [vmem:[%s865 + $0x20] sm:$0xf]
        %v875 = vld [vmem:[%s865 + $0x24] sm:$0xf]
        %v876 = vld [vmem:[%s865 + $0x28] sm:$0xf]
        %v877 = vld [vmem:[%s865 + $0x2c] sm:$0xf]
        %v878 = vld [vmem:[%s865 + $0x30] sm:$0xf]
        %v879 = vld [vmem:[%s865 + $0x34] sm:$0xf]
        %v880 = vld [vmem:[%s865 + $0x38] sm:$0xf]
        %v881 = vld [vmem:[%s865 + $0x3c] sm:$0xf]
        %v898 = vunpack.c.l.b16 %v866
        %v899 = vunpack.c.l.b16 %v867
        %v900 = vunpack.c.l.b16 %v868
        %v901 = vunpack.c.l.b16 %v869
        %v902 = vunpack.c.l.b16 %v870
        %v903 = vunpack.c.l.b16 %v871
        %v904 = vunpack.c.l.b16 %v872
        %v905 = vunpack.c.l.b16 %v873
        %v906 = vunpack.c.l.b16 %v874
        %v907 = vunpack.c.l.b16 %v875
        %v908 = vunpack.c.l.b16 %v876
        %v909 = vunpack.c.l.b16 %v877
        %v910 = vunpack.c.l.b16 %v878
        %v911 = vunpack.c.l.b16 %v879
        %v912 = vunpack.c.l.b16 %v880
        %v913 = vunpack.c.l.b16 %v881
        %v914 = vpack.c.b16 %v899, %v898
        %v915 = vpack.c.b16 %v901, %v900
        %v916 = vpack.c.b16 %v903, %v902
        %v917 = vpack.c.b16 %v905, %v904
        %v918 = vpack.c.b16 %v907, %v906
        %v919 = vpack.c.b16 %v909, %v908
        %v920 = vpack.c.b16 %v911, %v910
        %v921 = vpack.c.b16 %v913, %v912
        %930 = vmatprep.subr.bf16.mxu0 0
        %931 = vmatpush1.bf16.msra.mxu0 %v914
        %932 = vmatprep.subr.bf16.mxu0 0
        %933 = vmatpush1.bf16.msra.mxu0 %v915
        %934 = vmatprep.subr.bf16.mxu0 0
        %935 = vmatpush1.bf16.msra.mxu0 %v916
        %936 = vmatprep.subr.bf16.mxu0 0
        %937 = vmatpush1.bf16.msra.mxu0 %v917
        %938 = vmatprep.subr.bf16.mxu0 0
        %939 = vmatpush1.bf16.msra.mxu0 %v918
        %940 = vmatprep.subr.bf16.mxu0 0
        %941 = vmatpush1.bf16.msra.mxu0 %v919
        %942 = vmatprep.subr.bf16.mxu0 0
        %943 = vmatpush1.bf16.msra.mxu0 %v920
        %944 = vmatprep.subr.bf16.mxu0 0
        %945 = vmatpush1.bf16.msra.mxu0 %v921
        %946 = vmatprep.subr.bf16.mxu0 0
        %947 = vmatpush1.bf16.msra.mxu0 0
        %948 = vmatprep.subr.bf16.mxu0 0
        %949 = vmatpush1.bf16.msra.mxu0 0
        %950 = vmatprep.subr.bf16.mxu0 0
        %951 = vmatpush1.bf16.msra.mxu0 0
        %952 = vmatprep.subr.bf16.mxu0 0
        %953 = vmatpush1.bf16.msra.mxu0 0
        %954 = vmatprep.subr.bf16.mxu0 0
        %955 = vmatpush1.bf16.msra.mxu0 0
        %956 = vmatprep.subr.bf16.mxu0 0
        %957 = vmatpush1.bf16.msra.mxu0 0
        %958 = vmatprep.subr.bf16.mxu0 0
        %959 = vmatpush1.bf16.msra.mxu0 0
        %960 = vmatprep.subr.bf16.mxu0 0
        %961 = vmatpush1.bf16.msra.mxu0 0
        %962 = vmatprep.mubr.bf16.mxu0 0
        %963 = vmatmul.mubr.bf16.gmra.mrb[0].mxu0 %v857
        %v964 = vpop.f32.mrb[0].mxu0
        %v965 = vadd.f32 0.0, %v964
        %v966 = vpop.f32.mrb[0].mxu0
        %v967 = vpop.f32.mrb[0].mxu0
        %v968 = vadd.f32 0.0, %v967
        %v969 = vpop.f32.mrb[0].mxu0
        %970 = vmatprep.mubr.bf16.mxu0 0
        %971 = vmatmul.mubr.bf16.gmra.mrb[0].mxu0 %v858
        %v972 = vpop.f32.mrb[0].mxu0
        %v973 = vadd.f32 0.0, %v972
        %v974 = vpop.f32.mrb[0].mxu0
        %v975 = vpop.f32.mrb[0].mxu0
        %v976 = vadd.f32 0.0, %v975
        %v977 = vpop.f32.mrb[0].mxu0
        %978 = vmatprep.mubr.bf16.mxu0 0
        %979 = vmatmul.mubr.bf16.gmra.mrb[0].mxu0 %v859
        %v980 = vpop.f32.mrb[0].mxu0
        %v981 = vadd.f32 0.0, %v980
        %v982 = vpop.f32.mrb[0].mxu0
        %v983 = vpop.f32.mrb[0].mxu0
        %v984 = vadd.f32 0.0, %v983
        %v985 = vpop.f32.mrb[0].mxu0
        %986 = vmatprep.mubr.bf16.mxu0 0
        %987 = vmatmul.mubr.bf16.gmra.mrb[0].mxu0 %v860
        %v988 = vpop.f32.mrb[0].mxu0
        %v989 = vadd.f32 0.0, %v988
        %v990 = vpop.f32.mrb[0].mxu0
        %v991 = vpop.f32.mrb[0].mxu0
        %v992 = vadd.f32 0.0, %v991
        %v993 = vpop.f32.mrb[0].mxu0
        %994 = vmatprep.mubr.bf16.mxu0 0
        %995 = vmatmul.mubr.bf16.gmra.mrb[0].mxu0 %v861
        %v996 = vpop.f32.mrb[0].mxu0
        %v997 = vadd.f32 0.0, %v996
        %v998 = vpop.f32.mrb[0].mxu0
        %v999 = vpop.f32.mrb[0].mxu0
        %v1000 = vadd.f32 0.0, %v999
        %v1001 = vpop.f32.mrb[0].mxu0
        %1002 = vmatprep.mubr.bf16.mxu0 0
        %1003 = vmatmul.mubr.bf16.gmra.mrb[0].mxu0 %v862
        %v1004 = vpop.f32.mrb[0].mxu0
        %v1005 = vadd.f32 0.0, %v1004
        %v1006 = vpop.f32.mrb[0].mxu0
        %v1007 = vpop.f32.mrb[0].mxu0
        %v1008 = vadd.f32 0.0, %v1007
        %v1009 = vpop.f32.mrb[0].mxu0
        %1010 = vmatprep.mubr.bf16.mxu0 0
        %1011 = vmatmul.mubr.bf16.gmra.mrb[0].mxu0 %v863
        %v1012 = vpop.f32.mrb[0].mxu0
        %v1013 = vadd.f32 0.0, %v1012
        %v1014 = vpop.f32.mrb[0].mxu0
        %v1015 = vpop.f32.mrb[0].mxu0
        %v1016 = vadd.f32 0.0, %v1015
        %v1017 = vpop.f32.mrb[0].mxu0
        %1018 = vmatprep.mubr.bf16.mxu0 0
        %1019 = vmatmul.mubr.bf16.gmra.mrb[0].mxu0 %v864
        %v1020 = vpop.f32.mrb[0].mxu0
        %v1021 = vadd.f32 0.0, %v1020
        %v1022 = vpop.f32.mrb[0].mxu0
        %v1023 = vpop.f32.mrb[0].mxu0
        %v1024 = vadd.f32 0.0, %v1023
        %v1025 = vpop.f32.mrb[0].mxu0
        %1026 = vdwg.mxu0
        %v1027 = vadd.f32 %v823, %v965
        %v1028 = vadd.f32 %v824, %v968
        %v1029 = vadd.f32 %v825, %v973
        %v1030 = vadd.f32 %v826, %v976
        %v1031 = vadd.f32 %v827, %v981
        %v1032 = vadd.f32 %v828, %v984
        %v1033 = vadd.f32 %v829, %v989
        %v1034 = vadd.f32 %v830, %v992
        %v1035 = vadd.f32 %v831, %v997
        %v1036 = vadd.f32 %v832, %v1000
        %v1037 = vadd.f32 %v833, %v1005
        %v1038 = vadd.f32 %v834, %v1008
        %v1039 = vadd.f32 %v835, %v1013
        %v1040 = vadd.f32 %v836, %v1016
        %v1041 = vadd.f32 %v837, %v1021
        %v1042 = vadd.f32 %v838, %v1024
        %s1043 = sadd.s32 %s260, 19
        %s1044 = scalar_lea.vmem [#allocation2], %s1043
        %v1045 = vld [vmem:[%s1044] sm:$0xff]
        %v1046 = vld [vmem:[%s1044 + $0x8] sm:$0xff]
        %v1047 = vld [vmem:[%s1044 + $0x10] sm:$0xff]
        %v1048 = vld [vmem:[%s1044 + $0x18] sm:$0xff]
        %v1049 = vld [vmem:[%s1044 + $0x20] sm:$0xff]
        %v1050 = vld [vmem:[%s1044 + $0x28] sm:$0xff]
        %v1051 = vld [vmem:[%s1044 + $0x30] sm:$0xff]
        %v1052 = vld [vmem:[%s1044 + $0x38] sm:$0xff]
        %v1053 = vld [vmem:[%s1044 + $0x40] sm:$0xff]
        %v1054 = vld [vmem:[%s1044 + $0x48] sm:$0xff]
        %v1055 = vld [vmem:[%s1044 + $0x50] sm:$0xff]
        %v1056 = vld [vmem:[%s1044 + $0x58] sm:$0xff]
        %v1057 = vld [vmem:[%s1044 + $0x60] sm:$0xff]
        %v1058 = vld [vmem:[%s1044 + $0x68] sm:$0xff]
        %v1059 = vld [vmem:[%s1044 + $0x70] sm:$0xff]
        %v1060 = vld [vmem:[%s1044 + $0x78] sm:$0xff]
        %v1061 = vpack.c.bf16 %v1046, %v1045
        %v1062 = vpack.c.bf16 %v1048, %v1047
        %v1063 = vpack.c.bf16 %v1050, %v1049
        %v1064 = vpack.c.bf16 %v1052, %v1051
        %v1065 = vpack.c.bf16 %v1054, %v1053
        %v1066 = vpack.c.bf16 %v1056, %v1055
        %v1067 = vpack.c.bf16 %v1058, %v1057
        %v1068 = vpack.c.bf16 %v1060, %v1059
        %s1069 = scalar_lea.vmem [#allocation5], 256
        %v1070 = vld [vmem:[%s1069] sm:$0xf]
        %v1071 = vld [vmem:[%s1069 + $0x4] sm:$0xf]
        %v1072 = vld [vmem:[%s1069 + $0x8] sm:$0xf]
        %v1073 = vld [vmem:[%s1069 + $0xc] sm:$0xf]
        %v1074 = vld [vmem:[%s1069 + $0x10] sm:$0xf]
        %v1075 = vld [vmem:[%s1069 + $0x14] sm:$0xf]
        %v1076 = vld [vmem:[%s1069 + $0x18] sm:$0xf]
        %v1077 = vld [vmem:[%s1069 + $0x1c] sm:$0xf]
        %v1078 = vld [vmem:[%s1069 + $0x20] sm:$0xf]
        %v1079 = vld [vmem:[%s1069 + $0x24] sm:$0xf]
        %v1080 = vld [vmem:[%s1069 + $0x28] sm:$0xf]
        %v1081 = vld [vmem:[%s1069 + $0x2c] sm:$0xf]
        %v1082 = vld [vmem:[%s1069 + $0x30] sm:$0xf]
        %v1083 = vld [vmem:[%s1069 + $0x34] sm:$0xf]
        %v1084 = vld [vmem:[%s1069 + $0x38] sm:$0xf]
        %v1085 = vld [vmem:[%s1069 + $0x3c] sm:$0xf]
        %v1102 = vunpack.c.l.b16 %v1070
        %v1103 = vunpack.c.l.b16 %v1071
        %v1104 = vunpack.c.l.b16 %v1072
        %v1105 = vunpack.c.l.b16 %v1073
        %v1106 = vunpack.c.l.b16 %v1074
        %v1107 = vunpack.c.l.b16 %v1075
        %v1108 = vunpack.c.l.b16 %v1076
        %v1109 = vunpack.c.l.b16 %v1077
        %v1110 = vunpack.c.l.b16 %v1078
        %v1111 = vunpack.c.l.b16 %v1079
        %v1112 = vunpack.c.l.b16 %v1080
        %v1113 = vunpack.c.l.b16 %v1081
        %v1114 = vunpack.c.l.b16 %v1082
        %v1115 = vunpack.c.l.b16 %v1083
        %v1116 = vunpack.c.l.b16 %v1084
        %v1117 = vunpack.c.l.b16 %v1085
        %v1118 = vpack.c.b16 %v1103, %v1102
        %v1119 = vpack.c.b16 %v1105, %v1104
        %v1120 = vpack.c.b16 %v1107, %v1106
        %v1121 = vpack.c.b16 %v1109, %v1108
        %v1122 = vpack.c.b16 %v1111, %v1110
        %v1123 = vpack.c.b16 %v1113, %v1112
        %v1124 = vpack.c.b16 %v1115, %v1114
        %v1125 = vpack.c.b16 %v1117, %v1116
        %1134 = vmatprep.subr.bf16.mxu0 0
        %1135 = vmatpush1.bf16.msra.mxu0 %v1118
        %1136 = vmatprep.subr.bf16.mxu0 0
        %1137 = vmatpush1.bf16.msra.mxu0 %v1119
        %1138 = vmatprep.subr.bf16.mxu0 0
        %1139 = vmatpush1.bf16.msra.mxu0 %v1120
        %1140 = vmatprep.subr.bf16.mxu0 0
        %1141 = vmatpush1.bf16.msra.mxu0 %v1121
        %1142 = vmatprep.subr.bf16.mxu0 0
        %1143 = vmatpush1.bf16.msra.mxu0 %v1122
        %1144 = vmatprep.subr.bf16.mxu0 0
        %1145 = vmatpush1.bf16.msra.mxu0 %v1123
        %1146 = vmatprep.subr.bf16.mxu0 0
        %1147 = vmatpush1.bf16.msra.mxu0 %v1124
        %1148 = vmatprep.subr.bf16.mxu0 0
        %1149 = vmatpush1.bf16.msra.mxu0 %v1125
        %1150 = vmatprep.subr.bf16.mxu0 0
        %1151 = vmatpush1.bf16.msra.mxu0 0
        %1152 = vmatprep.subr.bf16.mxu0 0
        %1153 = vmatpush1.bf16.msra.mxu0 0
        %1154 = vmatprep.subr.bf16.mxu0 0
        %1155 = vmatpush1.bf16.msra.mxu0 0
        %1156 = vmatprep.subr.bf16.mxu0 0
        %1157 = vmatpush1.bf16.msra.mxu0 0
        %1158 = vmatprep.subr.bf16.mxu0 0
        %1159 = vmatpush1.bf16.msra.mxu0 0
        %1160 = vmatprep.subr.bf16.mxu0 0
        %1161 = vmatpush1.bf16.msra.mxu0 0
        %1162 = vmatprep.subr.bf16.mxu0 0
        %1163 = vmatpush1.bf16.msra.mxu0 0
        %1164 = vmatprep.subr.bf16.mxu0 0
        %1165 = vmatpush1.bf16.msra.mxu0 0
        %1166 = vmatprep.mubr.bf16.mxu0 0
        %1167 = vmatmul.mubr.bf16.gmra.mrb[0].mxu0 %v1061
        %v1168 = vpop.f32.mrb[0].mxu0
        %v1169 = vadd.f32 0.0, %v1168
        %v1170 = vpop.f32.mrb[0].mxu0
        %v1171 = vpop.f32.mrb[0].mxu0
        %v1172 = vadd.f32 0.0, %v1171
        %v1173 = vpop.f32.mrb[0].mxu0
        %1174 = vmatprep.mubr.bf16.mxu0 0
        %1175 = vmatmul.mubr.bf16.gmra.mrb[0].mxu0 %v1062
        %v1176 = vpop.f32.mrb[0].mxu0
        %v1177 = vadd.f32 0.0, %v1176
        %v1178 = vpop.f32.mrb[0].mxu0
        %v1179 = vpop.f32.mrb[0].mxu0
        %v1180 = vadd.f32 0.0, %v1179
        %v1181 = vpop.f32.mrb[0].mxu0
        %1182 = vmatprep.mubr.bf16.mxu0 0
        %1183 = vmatmul.mubr.bf16.gmra.mrb[0].mxu0 %v1063
        %v1184 = vpop.f32.mrb[0].mxu0
        %v1185 = vadd.f32 0.0, %v1184
        %v1186 = vpop.f32.mrb[0].mxu0
        %v1187 = vpop.f32.mrb[0].mxu0
        %v1188 = vadd.f32 0.0, %v1187
        %v1189 = vpop.f32.mrb[0].mxu0
        %1190 = vmatprep.mubr.bf16.mxu0 0
        %1191 = vmatmul.mubr.bf16.gmra.mrb[0].mxu0 %v1064
        %v1192 = vpop.f32.mrb[0].mxu0
        %v1193 = vadd.f32 0.0, %v1192
        %v1194 = vpop.f32.mrb[0].mxu0
        %v1195 = vpop.f32.mrb[0].mxu0
        %v1196 = vadd.f32 0.0, %v1195
        %v1197 = vpop.f32.mrb[0].mxu0
        %1198 = vmatprep.mubr.bf16.mxu0 0
        %1199 = vmatmul.mubr.bf16.gmra.mrb[0].mxu0 %v1065
        %v1200 = vpop.f32.mrb[0].mxu0
        %v1201 = vadd.f32 0.0, %v1200
        %v1202 = vpop.f32.mrb[0].mxu0
        %v1203 = vpop.f32.mrb[0].mxu0
        %v1204 = vadd.f32 0.0, %v1203
        %v1205 = vpop.f32.mrb[0].mxu0
        %1206 = vmatprep.mubr.bf16.mxu0 0
        %1207 = vmatmul.mubr.bf16.gmra.mrb[0].mxu0 %v1066
        %v1208 = vpop.f32.mrb[0].mxu0
        %v1209 = vadd.f32 0.0, %v1208
        %v1210 = vpop.f32.mrb[0].mxu0
        %v1211 = vpop.f32.mrb[0].mxu0
        %v1212 = vadd.f32 0.0, %v1211
        %v1213 = vpop.f32.mrb[0].mxu0
        %1214 = vmatprep.mubr.bf16.mxu0 0
        %1215 = vmatmul.mubr.bf16.gmra.mrb[0].mxu0 %v1067
        %v1216 = vpop.f32.mrb[0].mxu0
        %v1217 = vadd.f32 0.0, %v1216
        %v1218 = vpop.f32.mrb[0].mxu0
        %v1219 = vpop.f32.mrb[0].mxu0
        %v1220 = vadd.f32 0.0, %v1219
        %v1221 = vpop.f32.mrb[0].mxu0
        %1222 = vmatprep.mubr.bf16.mxu0 0
        %1223 = vmatmul.mubr.bf16.gmra.mrb[0].mxu0 %v1068
        %v1224 = vpop.f32.mrb[0].mxu0
        %v1225 = vadd.f32 0.0, %v1224
        %v1226 = vpop.f32.mrb[0].mxu0
        %v1227 = vpop.f32.mrb[0].mxu0
        %v1228 = vadd.f32 0.0, %v1227
        %v1229 = vpop.f32.mrb[0].mxu0
        %1230 = vdwg.mxu0
        %v1231 = vadd.f32 %v1027, %v1169
        %v1232 = vadd.f32 %v1028, %v1172
        %v1233 = vadd.f32 %v1029, %v1177
        %v1234 = vadd.f32 %v1030, %v1180
        %v1235 = vadd.f32 %v1031, %v1185
        %v1236 = vadd.f32 %v1032, %v1188
        %v1237 = vadd.f32 %v1033, %v1193
        %v1238 = vadd.f32 %v1034, %v1196
        %v1239 = vadd.f32 %v1035, %v1201
        %v1240 = vadd.f32 %v1036, %v1204
        %v1241 = vadd.f32 %v1037, %v1209
        %v1242 = vadd.f32 %v1038, %v1212
        %v1243 = vadd.f32 %v1039, %v1217
        %v1244 = vadd.f32 %v1040, %v1220
        %v1245 = vadd.f32 %v1041, %v1225
        %v1246 = vadd.f32 %v1042, %v1228
        %s1247 = sadd.s32 %s260, 20
        %s1248 = scalar_lea.vmem [#allocation2], %s1247
        %v1249 = vld [vmem:[%s1248] sm:$0xff]
        %v1250 = vld [vmem:[%s1248 + $0x8] sm:$0xff]
        %v1251 = vld [vmem:[%s1248 + $0x10] sm:$0xff]
        %v1252 = vld [vmem:[%s1248 + $0x18] sm:$0xff]
        %v1253 = vld [vmem:[%s1248 + $0x20] sm:$0xff]
        %v1254 = vld [vmem:[%s1248 + $0x28] sm:$0xff]
        %v1255 = vld [vmem:[%s1248 + $0x30] sm:$0xff]
        %v1256 = vld [vmem:[%s1248 + $0x38] sm:$0xff]
        %v1257 = vld [vmem:[%s1248 + $0x40] sm:$0xff]
        %v1258 = vld [vmem:[%s1248 + $0x48] sm:$0xff]
        %v1259 = vld [vmem:[%s1248 + $0x50] sm:$0xff]
        %v1260 = vld [vmem:[%s1248 + $0x58] sm:$0xff]
        %v1261 = vld [vmem:[%s1248 + $0x60] sm:$0xff]
        %v1262 = vld [vmem:[%s1248 + $0x68] sm:$0xff]
        %v1263 = vld [vmem:[%s1248 + $0x70] sm:$0xff]
        %v1264 = vld [vmem:[%s1248 + $0x78] sm:$0xff]
        %v1265 = vpack.c.bf16 %v1250, %v1249
        %v1266 = vpack.c.bf16 %v1252, %v1251
        %v1267 = vpack.c.bf16 %v1254, %v1253
        %v1268 = vpack.c.bf16 %v1256, %v1255
        %v1269 = vpack.c.bf16 %v1258, %v1257
        %v1270 = vpack.c.bf16 %v1260, %v1259
        %v1271 = vpack.c.bf16 %v1262, %v1261
        %v1272 = vpack.c.bf16 %v1264, %v1263
        %s1273 = scalar_lea.vmem [#allocation5], 320
        %v1274 = vld [vmem:[%s1273] sm:$0xf]
        %v1275 = vld [vmem:[%s1273 + $0x4] sm:$0xf]
        %v1276 = vld [vmem:[%s1273 + $0x8] sm:$0xf]
        %v1277 = vld [vmem:[%s1273 + $0xc] sm:$0xf]
        %v1278 = vld [vmem:[%s1273 + $0x10] sm:$0xf]
        %v1279 = vld [vmem:[%s1273 + $0x14] sm:$0xf]
        %v1280 = vld [vmem:[%s1273 + $0x18] sm:$0xf]
        %v1281 = vld [vmem:[%s1273 + $0x1c] sm:$0xf]
        %v1282 = vld [vmem:[%s1273 + $0x20] sm:$0xf]
        %v1283 = vld [vmem:[%s1273 + $0x24] sm:$0xf]
        %v1284 = vld [vmem:[%s1273 + $0x28] sm:$0xf]
        %v1285 = vld [vmem:[%s1273 + $0x2c] sm:$0xf]
        %v1286 = vld [vmem:[%s1273 + $0x30] sm:$0xf]
        %v1287 = vld [vmem:[%s1273 + $0x34] sm:$0xf]
        %v1288 = vld [vmem:[%s1273 + $0x38] sm:$0xf]
        %v1289 = vld [vmem:[%s1273 + $0x3c] sm:$0xf]
        %v1306 = vunpack.c.l.b16 %v1274
        %v1307 = vunpack.c.l.b16 %v1275
        %v1308 = vunpack.c.l.b16 %v1276
        %v1309 = vunpack.c.l.b16 %v1277
        %v1310 = vunpack.c.l.b16 %v1278
        %v1311 = vunpack.c.l.b16 %v1279
        %v1312 = vunpack.c.l.b16 %v1280
        %v1313 = vunpack.c.l.b16 %v1281
        %v1314 = vunpack.c.l.b16 %v1282
        %v1315 = vunpack.c.l.b16 %v1283
        %v1316 = vunpack.c.l.b16 %v1284
        %v1317 = vunpack.c.l.b16 %v1285
        %v1318 = vunpack.c.l.b16 %v1286
        %v1319 = vunpack.c.l.b16 %v1287
        %v1320 = vunpack.c.l.b16 %v1288
        %v1321 = vunpack.c.l.b16 %v1289
        %v1322 = vpack.c.b16 %v1307, %v1306
        %v1323 = vpack.c.b16 %v1309, %v1308
        %v1324 = vpack.c.b16 %v1311, %v1310
        %v1325 = vpack.c.b16 %v1313, %v1312
        %v1326 = vpack.c.b16 %v1315, %v1314
        %v1327 = vpack.c.b16 %v1317, %v1316
        %v1328 = vpack.c.b16 %v1319, %v1318
        %v1329 = vpack.c.b16 %v1321, %v1320
        %1338 = vmatprep.subr.bf16.mxu0 0
        %1339 = vmatpush1.bf16.msra.mxu0 %v1322
        %1340 = vmatprep.subr.bf16.mxu0 0
        %1341 = vmatpush1.bf16.msra.mxu0 %v1323
        %1342 = vmatprep.subr.bf16.mxu0 0
        %1343 = vmatpush1.bf16.msra.mxu0 %v1324
        %1344 = vmatprep.subr.bf16.mxu0 0
        %1345 = vmatpush1.bf16.msra.mxu0 %v1325
        %1346 = vmatprep.subr.bf16.mxu0 0
        %1347 = vmatpush1.bf16.msra.mxu0 %v1326
        %1348 = vmatprep.subr.bf16.mxu0 0
        %1349 = vmatpush1.bf16.msra.mxu0 %v1327
        %1350 = vmatprep.subr.bf16.mxu0 0
        %1351 = vmatpush1.bf16.msra.mxu0 %v1328
        %1352 = vmatprep.subr.bf16.mxu0 0
        %1353 = vmatpush1.bf16.msra.mxu0 %v1329
        %1354 = vmatprep.subr.bf16.mxu0 0
        %1355 = vmatpush1.bf16.msra.mxu0 0
        %1356 = vmatprep.subr.bf16.mxu0 0
        %1357 = vmatpush1.bf16.msra.mxu0 0
        %1358 = vmatprep.subr.bf16.mxu0 0
        %1359 = vmatpush1.bf16.msra.mxu0 0
        %1360 = vmatprep.subr.bf16.mxu0 0
        %1361 = vmatpush1.bf16.msra.mxu0 0
        %1362 = vmatprep.subr.bf16.mxu0 0
        %1363 = vmatpush1.bf16.msra.mxu0 0
        %1364 = vmatprep.subr.bf16.mxu0 0
        %1365 = vmatpush1.bf16.msra.mxu0 0
        %1366 = vmatprep.subr.bf16.mxu0 0
        %1367 = vmatpush1.bf16.msra.mxu0 0
        %1368 = vmatprep.subr.bf16.mxu0 0
        %1369 = vmatpush1.bf16.msra.mxu0 0
        %1370 = vmatprep.mubr.bf16.mxu0 0
        %1371 = vmatmul.mubr.bf16.gmra.mrb[0].mxu0 %v1265
        %v1372 = vpop.f32.mrb[0].mxu0
        %v1373 = vadd.f32 0.0, %v1372
        %v1374 = vpop.f32.mrb[0].mxu0
        %v1375 = vpop.f32.mrb[0].mxu0
        %v1376 = vadd.f32 0.0, %v1375
        %v1377 = vpop.f32.mrb[0].mxu0
        %1378 = vmatprep.mubr.bf16.mxu0 0
        %1379 = vmatmul.mubr.bf16.gmra.mrb[0].mxu0 %v1266
        %v1380 = vpop.f32.mrb[0].mxu0
        %v1381 = vadd.f32 0.0, %v1380
        %v1382 = vpop.f32.mrb[0].mxu0
        %v1383 = vpop.f32.mrb[0].mxu0
        %v1384 = vadd.f32 0.0, %v1383
        %v1385 = vpop.f32.mrb[0].mxu0
        %1386 = vmatprep.mubr.bf16.mxu0 0
        %1387 = vmatmul.mubr.bf16.gmra.mrb[0].mxu0 %v1267
        %v1388 = vpop.f32.mrb[0].mxu0
        %v1389 = vadd.f32 0.0, %v1388
        %v1390 = vpop.f32.mrb[0].mxu0
        %v1391 = vpop.f32.mrb[0].mxu0
        %v1392 = vadd.f32 0.0, %v1391
        %v1393 = vpop.f32.mrb[0].mxu0
        %1394 = vmatprep.mubr.bf16.mxu0 0
        %1395 = vmatmul.mubr.bf16.gmra.mrb[0].mxu0 %v1268
        %v1396 = vpop.f32.mrb[0].mxu0
        %v1397 = vadd.f32 0.0, %v1396
        %v1398 = vpop.f32.mrb[0].mxu0
        %v1399 = vpop.f32.mrb[0].mxu0
        %v1400 = vadd.f32 0.0, %v1399
        %v1401 = vpop.f32.mrb[0].mxu0
        %1402 = vmatprep.mubr.bf16.mxu0 0
        %1403 = vmatmul.mubr.bf16.gmra.mrb[0].mxu0 %v1269
        %v1404 = vpop.f32.mrb[0].mxu0
        %v1405 = vadd.f32 0.0, %v1404
        %v1406 = vpop.f32.mrb[0].mxu0
        %v1407 = vpop.f32.mrb[0].mxu0
        %v1408 = vadd.f32 0.0, %v1407
        %v1409 = vpop.f32.mrb[0].mxu0
        %1410 = vmatprep.mubr.bf16.mxu0 0
        %1411 = vmatmul.mubr.bf16.gmra.mrb[0].mxu0 %v1270
        %v1412 = vpop.f32.mrb[0].mxu0
        %v1413 = vadd.f32 0.0, %v1412
        %v1414 = vpop.f32.mrb[0].mxu0
        %v1415 = vpop.f32.mrb[0].mxu0
        %v1416 = vadd.f32 0.0, %v1415
        %v1417 = vpop.f32.mrb[0].mxu0
        %1418 = vmatprep.mubr.bf16.mxu0 0
        %1419 = vmatmul.mubr.bf16.gmra.mrb[0].mxu0 %v1271
        %v1420 = vpop.f32.mrb[0].mxu0
        %v1421 = vadd.f32 0.0, %v1420
        %v1422 = vpop.f32.mrb[0].mxu0
        %v1423 = vpop.f32.mrb[0].mxu0
        %v1424 = vadd.f32 0.0, %v1423
        %v1425 = vpop.f32.mrb[0].mxu0
        %1426 = vmatprep.mubr.bf16.mxu0 0
        %1427 = vmatmul.mubr.bf16.gmra.mrb[0].mxu0 %v1272
        %v1428 = vpop.f32.mrb[0].mxu0
        %v1429 = vadd.f32 0.0, %v1428
        %v1430 = vpop.f32.mrb[0].mxu0
        %v1431 = vpop.f32.mrb[0].mxu0
        %v1432 = vadd.f32 0.0, %v1431
        %v1433 = vpop.f32.mrb[0].mxu0
        %1434 = vdwg.mxu0
        %v1435 = vadd.f32 %v1231, %v1373
        %v1436 = vadd.f32 %v1232, %v1376
        %v1437 = vadd.f32 %v1233, %v1381
        %v1438 = vadd.f32 %v1234, %v1384
        %v1439 = vadd.f32 %v1235, %v1389
        %v1440 = vadd.f32 %v1236, %v1392
        %v1441 = vadd.f32 %v1237, %v1397
        %v1442 = vadd.f32 %v1238, %v1400
        %v1443 = vadd.f32 %v1239, %v1405
        %v1444 = vadd.f32 %v1240, %v1408
        %v1445 = vadd.f32 %v1241, %v1413
        %v1446 = vadd.f32 %v1242, %v1416
        %v1447 = vadd.f32 %v1243, %v1421
        %v1448 = vadd.f32 %v1244, %v1424
        %v1449 = vadd.f32 %v1245, %v1429
        %v1450 = vadd.f32 %v1246, %v1432
        %s1451 = sadd.s32 %s260, 36
        %s1452 = scalar_lea.vmem [#allocation2], %s1451
        %v1453 = vld [vmem:[%s1452] sm:$0xff]
        %v1454 = vld [vmem:[%s1452 + $0x8] sm:$0xff]
        %v1455 = vld [vmem:[%s1452 + $0x10] sm:$0xff]
        %v1456 = vld [vmem:[%s1452 + $0x18] sm:$0xff]
        %v1457 = vld [vmem:[%s1452 + $0x20] sm:$0xff]
        %v1458 = vld [vmem:[%s1452 + $0x28] sm:$0xff]
        %v1459 = vld [vmem:[%s1452 + $0x30] sm:$0xff]
        %v1460 = vld [vmem:[%s1452 + $0x38] sm:$0xff]
        %v1461 = vld [vmem:[%s1452 + $0x40] sm:$0xff]
        %v1462 = vld [vmem:[%s1452 + $0x48] sm:$0xff]
        %v1463 = vld [vmem:[%s1452 + $0x50] sm:$0xff]
        %v1464 = vld [vmem:[%s1452 + $0x58] sm:$0xff]
        %v1465 = vld [vmem:[%s1452 + $0x60] sm:$0xff]
        %v1466 = vld [vmem:[%s1452 + $0x68] sm:$0xff]
        %v1467 = vld [vmem:[%s1452 + $0x70] sm:$0xff]
        %v1468 = vld [vmem:[%s1452 + $0x78] sm:$0xff]
        %v1469 = vpack.c.bf16 %v1454, %v1453
        %v1470 = vpack.c.bf16 %v1456, %v1455
        %v1471 = vpack.c.bf16 %v1458, %v1457
        %v1472 = vpack.c.bf16 %v1460, %v1459
        %v1473 = vpack.c.bf16 %v1462, %v1461
        %v1474 = vpack.c.bf16 %v1464, %v1463
        %v1475 = vpack.c.bf16 %v1466, %v1465
        %v1476 = vpack.c.bf16 %v1468, %v1467
        %s1477 = scalar_lea.vmem [#allocation5], 384
        %v1478 = vld [vmem:[%s1477] sm:$0xf]
        %v1479 = vld [vmem:[%s1477 + $0x4] sm:$0xf]
        %v1480 = vld [vmem:[%s1477 + $0x8] sm:$0xf]
        %v1481 = vld [vmem:[%s1477 + $0xc] sm:$0xf]
        %v1482 = vld [vmem:[%s1477 + $0x10] sm:$0xf]
        %v1483 = vld [vmem:[%s1477 + $0x14] sm:$0xf]
        %v1484 = vld [vmem:[%s1477 + $0x18] sm:$0xf]
        %v1485 = vld [vmem:[%s1477 + $0x1c] sm:$0xf]
        %v1486 = vld [vmem:[%s1477 + $0x20] sm:$0xf]
        %v1487 = vld [vmem:[%s1477 + $0x24] sm:$0xf]
        %v1488 = vld [vmem:[%s1477 + $0x28] sm:$0xf]
        %v1489 = vld [vmem:[%s1477 + $0x2c] sm:$0xf]
        %v1490 = vld [vmem:[%s1477 + $0x30] sm:$0xf]
        %v1491 = vld [vmem:[%s1477 + $0x34] sm:$0xf]
        %v1492 = vld [vmem:[%s1477 + $0x38] sm:$0xf]
        %v1493 = vld [vmem:[%s1477 + $0x3c] sm:$0xf]
        %v1510 = vunpack.c.l.b16 %v1478
        %v1511 = vunpack.c.l.b16 %v1479
        %v1512 = vunpack.c.l.b16 %v1480
        %v1513 = vunpack.c.l.b16 %v1481
        %v1514 = vunpack.c.l.b16 %v1482
        %v1515 = vunpack.c.l.b16 %v1483
        %v1516 = vunpack.c.l.b16 %v1484
        %v1517 = vunpack.c.l.b16 %v1485
        %v1518 = vunpack.c.l.b16 %v1486
        %v1519 = vunpack.c.l.b16 %v1487
        %v1520 = vunpack.c.l.b16 %v1488
        %v1521 = vunpack.c.l.b16 %v1489
        %v1522 = vunpack.c.l.b16 %v1490
        %v1523 = vunpack.c.l.b16 %v1491
        %v1524 = vunpack.c.l.b16 %v1492
        %v1525 = vunpack.c.l.b16 %v1493
        %v1526 = vpack.c.b16 %v1511, %v1510
        %v1527 = vpack.c.b16 %v1513, %v1512
        %v1528 = vpack.c.b16 %v1515, %v1514
        %v1529 = vpack.c.b16 %v1517, %v1516
        %v1530 = vpack.c.b16 %v1519, %v1518
        %v1531 = vpack.c.b16 %v1521, %v1520
        %v1532 = vpack.c.b16 %v1523, %v1522
        %v1533 = vpack.c.b16 %v1525, %v1524
        %1542 = vmatprep.subr.bf16.mxu0 0
        %1543 = vmatpush1.bf16.msra.mxu0 %v1526
        %1544 = vmatprep.subr.bf16.mxu0 0
        %1545 = vmatpush1.bf16.msra.mxu0 %v1527
        %1546 = vmatprep.subr.bf16.mxu0 0
        %1547 = vmatpush1.bf16.msra.mxu0 %v1528
        %1548 = vmatprep.subr.bf16.mxu0 0
        %1549 = vmatpush1.bf16.msra.mxu0 %v1529
        %1550 = vmatprep.subr.bf16.mxu0 0
        %1551 = vmatpush1.bf16.msra.mxu0 %v1530
        %1552 = vmatprep.subr.bf16.mxu0 0
        %1553 = vmatpush1.bf16.msra.mxu0 %v1531
        %1554 = vmatprep.subr.bf16.mxu0 0
        %1555 = vmatpush1.bf16.msra.mxu0 %v1532
        %1556 = vmatprep.subr.bf16.mxu0 0
        %1557 = vmatpush1.bf16.msra.mxu0 %v1533
        %1558 = vmatprep.subr.bf16.mxu0 0
        %1559 = vmatpush1.bf16.msra.mxu0 0
        %1560 = vmatprep.subr.bf16.mxu0 0
        %1561 = vmatpush1.bf16.msra.mxu0 0
        %1562 = vmatprep.subr.bf16.mxu0 0
        %1563 = vmatpush1.bf16.msra.mxu0 0
        %1564 = vmatprep.subr.bf16.mxu0 0
        %1565 = vmatpush1.bf16.msra.mxu0 0
        %1566 = vmatprep.subr.bf16.mxu0 0
        %1567 = vmatpush1.bf16.msra.mxu0 0
        %1568 = vmatprep.subr.bf16.mxu0 0
        %1569 = vmatpush1.bf16.msra.mxu0 0
        %1570 = vmatprep.subr.bf16.mxu0 0
        %1571 = vmatpush1.bf16.msra.mxu0 0
        %1572 = vmatprep.subr.bf16.mxu0 0
        %1573 = vmatpush1.bf16.msra.mxu0 0
        %1574 = vmatprep.mubr.bf16.mxu0 0
        %1575 = vmatmul.mubr.bf16.gmra.mrb[0].mxu0 %v1469
        %v1576 = vpop.f32.mrb[0].mxu0
        %v1577 = vadd.f32 0.0, %v1576
        %v1578 = vpop.f32.mrb[0].mxu0
        %v1579 = vpop.f32.mrb[0].mxu0
        %v1580 = vadd.f32 0.0, %v1579
        %v1581 = vpop.f32.mrb[0].mxu0
        %1582 = vmatprep.mubr.bf16.mxu0 0
        %1583 = vmatmul.mubr.bf16.gmra.mrb[0].mxu0 %v1470
        %v1584 = vpop.f32.mrb[0].mxu0
        %v1585 = vadd.f32 0.0, %v1584
        %v1586 = vpop.f32.mrb[0].mxu0
        %v1587 = vpop.f32.mrb[0].mxu0
        %v1588 = vadd.f32 0.0, %v1587
        %v1589 = vpop.f32.mrb[0].mxu0
        %1590 = vmatprep.mubr.bf16.mxu0 0
        %1591 = vmatmul.mubr.bf16.gmra.mrb[0].mxu0 %v1471
        %v1592 = vpop.f32.mrb[0].mxu0
        %v1593 = vadd.f32 0.0, %v1592
        %v1594 = vpop.f32.mrb[0].mxu0
        %v1595 = vpop.f32.mrb[0].mxu0
        %v1596 = vadd.f32 0.0, %v1595
        %v1597 = vpop.f32.mrb[0].mxu0
        %1598 = vmatprep.mubr.bf16.mxu0 0
        %1599 = vmatmul.mubr.bf16.gmra.mrb[0].mxu0 %v1472
        %v1600 = vpop.f32.mrb[0].mxu0
        %v1601 = vadd.f32 0.0, %v1600
        %v1602 = vpop.f32.mrb[0].mxu0
        %v1603 = vpop.f32.mrb[0].mxu0
        %v1604 = vadd.f32 0.0, %v1603
        %v1605 = vpop.f32.mrb[0].mxu0
        %1606 = vmatprep.mubr.bf16.mxu0 0
        %1607 = vmatmul.mubr.bf16.gmra.mrb[0].mxu0 %v1473
        %v1608 = vpop.f32.mrb[0].mxu0
        %v1609 = vadd.f32 0.0, %v1608
        %v1610 = vpop.f32.mrb[0].mxu0
        %v1611 = vpop.f32.mrb[0].mxu0
        %v1612 = vadd.f32 0.0, %v1611
        %v1613 = vpop.f32.mrb[0].mxu0
        %1614 = vmatprep.mubr.bf16.mxu0 0
        %1615 = vmatmul.mubr.bf16.gmra.mrb[0].mxu0 %v1474
        %v1616 = vpop.f32.mrb[0].mxu0
        %v1617 = vadd.f32 0.0, %v1616
        %v1618 = vpop.f32.mrb[0].mxu0
        %v1619 = vpop.f32.mrb[0].mxu0
        %v1620 = vadd.f32 0.0, %v1619
        %v1621 = vpop.f32.mrb[0].mxu0
        %1622 = vmatprep.mubr.bf16.mxu0 0
        %1623 = vmatmul.mubr.bf16.gmra.mrb[0].mxu0 %v1475
        %v1624 = vpop.f32.mrb[0].mxu0
        %v1625 = vadd.f32 0.0, %v1624
        %v1626 = vpop.f32.mrb[0].mxu0
        %v1627 = vpop.f32.mrb[0].mxu0
        %v1628 = vadd.f32 0.0, %v1627
        %v1629 = vpop.f32.mrb[0].mxu0
        %1630 = vmatprep.mubr.bf16.mxu0 0
        %1631 = vmatmul.mubr.bf16.gmra.mrb[0].mxu0 %v1476
        %v1632 = vpop.f32.mrb[0].mxu0
        %v1633 = vadd.f32 0.0, %v1632
        %v1634 = vpop.f32.mrb[0].mxu0
        %v1635 = vpop.f32.mrb[0].mxu0
        %v1636 = vadd.f32 0.0, %v1635
        %v1637 = vpop.f32.mrb[0].mxu0
        %1638 = vdwg.mxu0
        %v1639 = vadd.f32 %v1435, %v1577
        %v1640 = vadd.f32 %v1436, %v1580
        %v1641 = vadd.f32 %v1437, %v1585
        %v1642 = vadd.f32 %v1438, %v1588
        %v1643 = vadd.f32 %v1439, %v1593
        %v1644 = vadd.f32 %v1440, %v1596
        %v1645 = vadd.f32 %v1441, %v1601
        %v1646 = vadd.f32 %v1442, %v1604
        %v1647 = vadd.f32 %v1443, %v1609
        %v1648 = vadd.f32 %v1444, %v1612
        %v1649 = vadd.f32 %v1445, %v1617
        %v1650 = vadd.f32 %v1446, %v1620
        %v1651 = vadd.f32 %v1447, %v1625
        %v1652 = vadd.f32 %v1448, %v1628
        %v1653 = vadd.f32 %v1449, %v1633
        %v1654 = vadd.f32 %v1450, %v1636
        %s1655 = sadd.s32 %s260, 37
        %s1656 = scalar_lea.vmem [#allocation2], %s1655
        %v1657 = vld [vmem:[%s1656] sm:$0xff]
        %v1658 = vld [vmem:[%s1656 + $0x8] sm:$0xff]
        %v1659 = vld [vmem:[%s1656 + $0x10] sm:$0xff]
        %v1660 = vld [vmem:[%s1656 + $0x18] sm:$0xff]
        %v1661 = vld [vmem:[%s1656 + $0x20] sm:$0xff]
        %v1662 = vld [vmem:[%s1656 + $0x28] sm:$0xff]
        %v1663 = vld [vmem:[%s1656 + $0x30] sm:$0xff]
        %v1664 = vld [vmem:[%s1656 + $0x38] sm:$0xff]
        %v1665 = vld [vmem:[%s1656 + $0x40] sm:$0xff]
        %v1666 = vld [vmem:[%s1656 + $0x48] sm:$0xff]
        %v1667 = vld [vmem:[%s1656 + $0x50] sm:$0xff]
        %v1668 = vld [vmem:[%s1656 + $0x58] sm:$0xff]
        %v1669 = vld [vmem:[%s1656 + $0x60] sm:$0xff]
        %v1670 = vld [vmem:[%s1656 + $0x68] sm:$0xff]
        %v1671 = vld [vmem:[%s1656 + $0x70] sm:$0xff]
        %v1672 = vld [vmem:[%s1656 + $0x78] sm:$0xff]
        %v1673 = vpack.c.bf16 %v1658, %v1657
        %v1674 = vpack.c.bf16 %v1660, %v1659
        %v1675 = vpack.c.bf16 %v1662, %v1661
        %v1676 = vpack.c.bf16 %v1664, %v1663
        %v1677 = vpack.c.bf16 %v1666, %v1665
        %v1678 = vpack.c.bf16 %v1668, %v1667
        %v1679 = vpack.c.bf16 %v1670, %v1669
        %v1680 = vpack.c.bf16 %v1672, %v1671
        %s1681 = scalar_lea.vmem [#allocation5], 448
        %v1682 = vld [vmem:[%s1681] sm:$0xf]
        %v1683 = vld [vmem:[%s1681 + $0x4] sm:$0xf]
        %v1684 = vld [vmem:[%s1681 + $0x8] sm:$0xf]
        %v1685 = vld [vmem:[%s1681 + $0xc] sm:$0xf]
        %v1686 = vld [vmem:[%s1681 + $0x10] sm:$0xf]
        %v1687 = vld [vmem:[%s1681 + $0x14] sm:$0xf]
        %v1688 = vld [vmem:[%s1681 + $0x18] sm:$0xf]
        %v1689 = vld [vmem:[%s1681 + $0x1c] sm:$0xf]
        %v1690 = vld [vmem:[%s1681 + $0x20] sm:$0xf]
        %v1691 = vld [vmem:[%s1681 + $0x24] sm:$0xf]
        %v1692 = vld [vmem:[%s1681 + $0x28] sm:$0xf]
        %v1693 = vld [vmem:[%s1681 + $0x2c] sm:$0xf]
        %v1694 = vld [vmem:[%s1681 + $0x30] sm:$0xf]
        %v1695 = vld [vmem:[%s1681 + $0x34] sm:$0xf]
        %v1696 = vld [vmem:[%s1681 + $0x38] sm:$0xf]
        %v1697 = vld [vmem:[%s1681 + $0x3c] sm:$0xf]
        %v1714 = vunpack.c.l.b16 %v1682
        %v1715 = vunpack.c.l.b16 %v1683
        %v1716 = vunpack.c.l.b16 %v1684
        %v1717 = vunpack.c.l.b16 %v1685
        %v1718 = vunpack.c.l.b16 %v1686
        %v1719 = vunpack.c.l.b16 %v1687
        %v1720 = vunpack.c.l.b16 %v1688
        %v1721 = vunpack.c.l.b16 %v1689
        %v1722 = vunpack.c.l.b16 %v1690
        %v1723 = vunpack.c.l.b16 %v1691
        %v1724 = vunpack.c.l.b16 %v1692
        %v1725 = vunpack.c.l.b16 %v1693
        %v1726 = vunpack.c.l.b16 %v1694
        %v1727 = vunpack.c.l.b16 %v1695
        %v1728 = vunpack.c.l.b16 %v1696
        %v1729 = vunpack.c.l.b16 %v1697
        %v1730 = vpack.c.b16 %v1715, %v1714
        %v1731 = vpack.c.b16 %v1717, %v1716
        %v1732 = vpack.c.b16 %v1719, %v1718
        %v1733 = vpack.c.b16 %v1721, %v1720
        %v1734 = vpack.c.b16 %v1723, %v1722
        %v1735 = vpack.c.b16 %v1725, %v1724
        %v1736 = vpack.c.b16 %v1727, %v1726
        %v1737 = vpack.c.b16 %v1729, %v1728
        %1746 = vmatprep.subr.bf16.mxu0 0
        %1747 = vmatpush1.bf16.msra.mxu0 %v1730
        %1748 = vmatprep.subr.bf16.mxu0 0
        %1749 = vmatpush1.bf16.msra.mxu0 %v1731
        %1750 = vmatprep.subr.bf16.mxu0 0
        %1751 = vmatpush1.bf16.msra.mxu0 %v1732
        %1752 = vmatprep.subr.bf16.mxu0 0
        %1753 = vmatpush1.bf16.msra.mxu0 %v1733
        %1754 = vmatprep.subr.bf16.mxu0 0
        %1755 = vmatpush1.bf16.msra.mxu0 %v1734
        %1756 = vmatprep.subr.bf16.mxu0 0
        %1757 = vmatpush1.bf16.msra.mxu0 %v1735
        %1758 = vmatprep.subr.bf16.mxu0 0
        %1759 = vmatpush1.bf16.msra.mxu0 %v1736
        %1760 = vmatprep.subr.bf16.mxu0 0
        %1761 = vmatpush1.bf16.msra.mxu0 %v1737
        %1762 = vmatprep.subr.bf16.mxu0 0
        %1763 = vmatpush1.bf16.msra.mxu0 0
        %1764 = vmatprep.subr.bf16.mxu0 0
        %1765 = vmatpush1.bf16.msra.mxu0 0
        %1766 = vmatprep.subr.bf16.mxu0 0
        %1767 = vmatpush1.bf16.msra.mxu0 0
        %1768 = vmatprep.subr.bf16.mxu0 0
        %1769 = vmatpush1.bf16.msra.mxu0 0
        %1770 = vmatprep.subr.bf16.mxu0 0
        %1771 = vmatpush1.bf16.msra.mxu0 0
        %1772 = vmatprep.subr.bf16.mxu0 0
        %1773 = vmatpush1.bf16.msra.mxu0 0
        %1774 = vmatprep.subr.bf16.mxu0 0
        %1775 = vmatpush1.bf16.msra.mxu0 0
        %1776 = vmatprep.subr.bf16.mxu0 0
        %1777 = vmatpush1.bf16.msra.mxu0 0
        %1778 = vmatprep.mubr.bf16.mxu0 0
        %1779 = vmatmul.mubr.bf16.gmra.mrb[0].mxu0 %v1673
        %v1780 = vpop.f32.mrb[0].mxu0
        %v1781 = vadd.f32 0.0, %v1780
        %v1782 = vpop.f32.mrb[0].mxu0
        %v1783 = vpop.f32.mrb[0].mxu0
        %v1784 = vadd.f32 0.0, %v1783
        %v1785 = vpop.f32.mrb[0].mxu0
        %1786 = vmatprep.mubr.bf16.mxu0 0
        %1787 = vmatmul.mubr.bf16.gmra.mrb[0].mxu0 %v1674
        %v1788 = vpop.f32.mrb[0].mxu0
        %v1789 = vadd.f32 0.0, %v1788
        %v1790 = vpop.f32.mrb[0].mxu0
        %v1791 = vpop.f32.mrb[0].mxu0
        %v1792 = vadd.f32 0.0, %v1791
        %v1793 = vpop.f32.mrb[0].mxu0
        %1794 = vmatprep.mubr.bf16.mxu0 0
        %1795 = vmatmul.mubr.bf16.gmra.mrb[0].mxu0 %v1675
        %v1796 = vpop.f32.mrb[0].mxu0
        %v1797 = vadd.f32 0.0, %v1796
        %v1798 = vpop.f32.mrb[0].mxu0
        %v1799 = vpop.f32.mrb[0].mxu0
        %v1800 = vadd.f32 0.0, %v1799
        %v1801 = vpop.f32.mrb[0].mxu0
        %1802 = vmatprep.mubr.bf16.mxu0 0
        %1803 = vmatmul.mubr.bf16.gmra.mrb[0].mxu0 %v1676
        %v1804 = vpop.f32.mrb[0].mxu0
        %v1805 = vadd.f32 0.0, %v1804
        %v1806 = vpop.f32.mrb[0].mxu0
        %v1807 = vpop.f32.mrb[0].mxu0
        %v1808 = vadd.f32 0.0, %v1807
        %v1809 = vpop.f32.mrb[0].mxu0
        %1810 = vmatprep.mubr.bf16.mxu0 0
        %1811 = vmatmul.mubr.bf16.gmra.mrb[0].mxu0 %v1677
        %v1812 = vpop.f32.mrb[0].mxu0
        %v1813 = vadd.f32 0.0, %v1812
        %v1814 = vpop.f32.mrb[0].mxu0
        %v1815 = vpop.f32.mrb[0].mxu0
        %v1816 = vadd.f32 0.0, %v1815
        %v1817 = vpop.f32.mrb[0].mxu0
        %1818 = vmatprep.mubr.bf16.mxu0 0
        %1819 = vmatmul.mubr.bf16.gmra.mrb[0].mxu0 %v1678
        %v1820 = vpop.f32.mrb[0].mxu0
        %v1821 = vadd.f32 0.0, %v1820
        %v1822 = vpop.f32.mrb[0].mxu0
        %v1823 = vpop.f32.mrb[0].mxu0
        %v1824 = vadd.f32 0.0, %v1823
        %v1825 = vpop.f32.mrb[0].mxu0
        %1826 = vmatprep.mubr.bf16.mxu0 0
        %1827 = vmatmul.mubr.bf16.gmra.mrb[0].mxu0 %v1679
        %v1828 = vpop.f32.mrb[0].mxu0
        %v1829 = vadd.f32 0.0, %v1828
        %v1830 = vpop.f32.mrb[0].mxu0
        %v1831 = vpop.f32.mrb[0].mxu0
        %v1832 = vadd.f32 0.0, %v1831
        %v1833 = vpop.f32.mrb[0].mxu0
        %1834 = vmatprep.mubr.bf16.mxu0 0
        %1835 = vmatmul.mubr.bf16.gmra.mrb[0].mxu0 %v1680
        %v1836 = vpop.f32.mrb[0].mxu0
        %v1837 = vadd.f32 0.0, %v1836
        %v1838 = vpop.f32.mrb[0].mxu0
        %v1839 = vpop.f32.mrb[0].mxu0
        %v1840 = vadd.f32 0.0, %v1839
        %v1841 = vpop.f32.mrb[0].mxu0
        %1842 = vdwg.mxu0
        %v1843 = vadd.f32 %v1639, %v1781
        %v1844 = vadd.f32 %v1640, %v1784
        %v1845 = vadd.f32 %v1641, %v1789
        %v1846 = vadd.f32 %v1642, %v1792
        %v1847 = vadd.f32 %v1643, %v1797
        %v1848 = vadd.f32 %v1644, %v1800
        %v1849 = vadd.f32 %v1645, %v1805
        %v1850 = vadd.f32 %v1646, %v1808
        %v1851 = vadd.f32 %v1647, %v1813
        %v1852 = vadd.f32 %v1648, %v1816
        %v1853 = vadd.f32 %v1649, %v1821
        %v1854 = vadd.f32 %v1650, %v1824
        %v1855 = vadd.f32 %v1651, %v1829
        %v1856 = vadd.f32 %v1652, %v1832
        %v1857 = vadd.f32 %v1653, %v1837
        %v1858 = vadd.f32 %v1654, %v1840
        %s1859 = sadd.s32 %s260, 38
        %s1860 = scalar_lea.vmem [#allocation2], %s1859
        %v1861 = vld [vmem:[%s1860] sm:$0xff]
        %v1862 = vld [vmem:[%s1860 + $0x8] sm:$0xff]
        %v1863 = vld [vmem:[%s1860 + $0x10] sm:$0xff]
        %v1864 = vld [vmem:[%s1860 + $0x18] sm:$0xff]
        %v1865 = vld [vmem:[%s1860 + $0x20] sm:$0xff]
        %v1866 = vld [vmem:[%s1860 + $0x28] sm:$0xff]
        %v1867 = vld [vmem:[%s1860 + $0x30] sm:$0xff]
        %v1868 = vld [vmem:[%s1860 + $0x38] sm:$0xff]
        %v1869 = vld [vmem:[%s1860 + $0x40] sm:$0xff]
        %v1870 = vld [vmem:[%s1860 + $0x48] sm:$0xff]
        %v1871 = vld [vmem:[%s1860 + $0x50] sm:$0xff]
        %v1872 = vld [vmem:[%s1860 + $0x58] sm:$0xff]
        %v1873 = vld [vmem:[%s1860 + $0x60] sm:$0xff]
        %v1874 = vld [vmem:[%s1860 + $0x68] sm:$0xff]
        %v1875 = vld [vmem:[%s1860 + $0x70] sm:$0xff]
        %v1876 = vld [vmem:[%s1860 + $0x78] sm:$0xff]
        %v1877 = vpack.c.bf16 %v1862, %v1861
        %v1878 = vpack.c.bf16 %v1864, %v1863
        %v1879 = vpack.c.bf16 %v1866, %v1865
        %v1880 = vpack.c.bf16 %v1868, %v1867
        %v1881 = vpack.c.bf16 %v1870, %v1869
        %v1882 = vpack.c.bf16 %v1872, %v1871
        %v1883 = vpack.c.bf16 %v1874, %v1873
        %v1884 = vpack.c.bf16 %v1876, %v1875
        %s1885 = scalar_lea.vmem [#allocation5], 512
        %v1886 = vld [vmem:[%s1885] sm:$0xf]
        %v1887 = vld [vmem:[%s1885 + $0x4] sm:$0xf]
        %v1888 = vld [vmem:[%s1885 + $0x8] sm:$0xf]
        %v1889 = vld [vmem:[%s1885 + $0xc] sm:$0xf]
        %v1890 = vld [vmem:[%s1885 + $0x10] sm:$0xf]
        %v1891 = vld [vmem:[%s1885 + $0x14] sm:$0xf]
        %v1892 = vld [vmem:[%s1885 + $0x18] sm:$0xf]
        %v1893 = vld [vmem:[%s1885 + $0x1c] sm:$0xf]
        %v1894 = vld [vmem:[%s1885 + $0x20] sm:$0xf]
        %v1895 = vld [vmem:[%s1885 + $0x24] sm:$0xf]
        %v1896 = vld [vmem:[%s1885 + $0x28] sm:$0xf]
        %v1897 = vld [vmem:[%s1885 + $0x2c] sm:$0xf]
        %v1898 = vld [vmem:[%s1885 + $0x30] sm:$0xf]
        %v1899 = vld [vmem:[%s1885 + $0x34] sm:$0xf]
        %v1900 = vld [vmem:[%s1885 + $0x38] sm:$0xf]
        %v1901 = vld [vmem:[%s1885 + $0x3c] sm:$0xf]
        %v1918 = vunpack.c.l.b16 %v1886
        %v1919 = vunpack.c.l.b16 %v1887
        %v1920 = vunpack.c.l.b16 %v1888
        %v1921 = vunpack.c.l.b16 %v1889
        %v1922 = vunpack.c.l.b16 %v1890
        %v1923 = vunpack.c.l.b16 %v1891
        %v1924 = vunpack.c.l.b16 %v1892
        %v1925 = vunpack.c.l.b16 %v1893
        %v1926 = vunpack.c.l.b16 %v1894
        %v1927 = vunpack.c.l.b16 %v1895
        %v1928 = vunpack.c.l.b16 %v1896
        %v1929 = vunpack.c.l.b16 %v1897
        %v1930 = vunpack.c.l.b16 %v1898
        %v1931 = vunpack.c.l.b16 %v1899
        %v1932 = vunpack.c.l.b16 %v1900
        %v1933 = vunpack.c.l.b16 %v1901
        %v1934 = vpack.c.b16 %v1919, %v1918
        %v1935 = vpack.c.b16 %v1921, %v1920
        %v1936 = vpack.c.b16 %v1923, %v1922
        %v1937 = vpack.c.b16 %v1925, %v1924
        %v1938 = vpack.c.b16 %v1927, %v1926
        %v1939 = vpack.c.b16 %v1929, %v1928
        %v1940 = vpack.c.b16 %v1931, %v1930
        %v1941 = vpack.c.b16 %v1933, %v1932
        %1950 = vmatprep.subr.bf16.mxu0 0
        %1951 = vmatpush1.bf16.msra.mxu0 %v1934
        %1952 = vmatprep.subr.bf16.mxu0 0
        %1953 = vmatpush1.bf16.msra.mxu0 %v1935
        %1954 = vmatprep.subr.bf16.mxu0 0
        %1955 = vmatpush1.bf16.msra.mxu0 %v1936
        %1956 = vmatprep.subr.bf16.mxu0 0
        %1957 = vmatpush1.bf16.msra.mxu0 %v1937
        %1958 = vmatprep.subr.bf16.mxu0 0
        %1959 = vmatpush1.bf16.msra.mxu0 %v1938
        %1960 = vmatprep.subr.bf16.mxu0 0
        %1961 = vmatpush1.bf16.msra.mxu0 %v1939
        %1962 = vmatprep.subr.bf16.mxu0 0
        %1963 = vmatpush1.bf16.msra.mxu0 %v1940
        %1964 = vmatprep.subr.bf16.mxu0 0
        %1965 = vmatpush1.bf16.msra.mxu0 %v1941
        %1966 = vmatprep.subr.bf16.mxu0 0
        %1967 = vmatpush1.bf16.msra.mxu0 0
        %1968 = vmatprep.subr.bf16.mxu0 0
        %1969 = vmatpush1.bf16.msra.mxu0 0
        %1970 = vmatprep.subr.bf16.mxu0 0
        %1971 = vmatpush1.bf16.msra.mxu0 0
        %1972 = vmatprep.subr.bf16.mxu0 0
        %1973 = vmatpush1.bf16.msra.mxu0 0
        %1974 = vmatprep.subr.bf16.mxu0 0
        %1975 = vmatpush1.bf16.msra.mxu0 0
        %1976 = vmatprep.subr.bf16.mxu0 0
        %1977 = vmatpush1.bf16.msra.mxu0 0
        %1978 = vmatprep.subr.bf16.mxu0 0
        %1979 = vmatpush1.bf16.msra.mxu0 0
        %1980 = vmatprep.subr.bf16.mxu0 0
        %1981 = vmatpush1.bf16.msra.mxu0 0
        %1982 = vmatprep.mubr.bf16.mxu0 0
        %1983 = vmatmul.mubr.bf16.gmra.mrb[0].mxu0 %v1877
        %v1984 = vpop.f32.mrb[0].mxu0
        %v1985 = vadd.f32 0.0, %v1984
        %v1986 = vpop.f32.mrb[0].mxu0
        %v1987 = vpop.f32.mrb[0].mxu0
        %v1988 = vadd.f32 0.0, %v1987
        %v1989 = vpop.f32.mrb[0].mxu0
        %1990 = vmatprep.mubr.bf16.mxu0 0
        %1991 = vmatmul.mubr.bf16.gmra.mrb[0].mxu0 %v1878
        %v1992 = vpop.f32.mrb[0].mxu0
        %v1993 = vadd.f32 0.0, %v1992
        %v1994 = vpop.f32.mrb[0].mxu0
        %v1995 = vpop.f32.mrb[0].mxu0
        %v1996 = vadd.f32 0.0, %v1995
        %v1997 = vpop.f32.mrb[0].mxu0
        %1998 = vmatprep.mubr.bf16.mxu0 0
        %1999 = vmatmul.mubr.bf16.gmra.mrb[0].mxu0 %v1879
        %v2000 = vpop.f32.mrb[0].mxu0
        %v2001 = vadd.f32 0.0, %v2000
        %v2002 = vpop.f32.mrb[0].mxu0
        %v2003 = vpop.f32.mrb[0].mxu0
        %v2004 = vadd.f32 0.0, %v2003
        %v2005 = vpop.f32.mrb[0].mxu0
        %2006 = vmatprep.mubr.bf16.mxu0 0
        %2007 = vmatmul.mubr.bf16.gmra.mrb[0].mxu0 %v1880
        %v2008 = vpop.f32.mrb[0].mxu0
        %v2009 = vadd.f32 0.0, %v2008
        %v2010 = vpop.f32.mrb[0].mxu0
        %v2011 = vpop.f32.mrb[0].mxu0
        %v2012 = vadd.f32 0.0, %v2011
        %v2013 = vpop.f32.mrb[0].mxu0
        %2014 = vmatprep.mubr.bf16.mxu0 0
        %2015 = vmatmul.mubr.bf16.gmra.mrb[0].mxu0 %v1881
        %v2016 = vpop.f32.mrb[0].mxu0
        %v2017 = vadd.f32 0.0, %v2016
        %v2018 = vpop.f32.mrb[0].mxu0
        %v2019 = vpop.f32.mrb[0].mxu0
        %v2020 = vadd.f32 0.0, %v2019
        %v2021 = vpop.f32.mrb[0].mxu0
        %2022 = vmatprep.mubr.bf16.mxu0 0
        %2023 = vmatmul.mubr.bf16.gmra.mrb[0].mxu0 %v1882
        %v2024 = vpop.f32.mrb[0].mxu0
        %v2025 = vadd.f32 0.0, %v2024
        %v2026 = vpop.f32.mrb[0].mxu0
        %v2027 = vpop.f32.mrb[0].mxu0
        %v2028 = vadd.f32 0.0, %v2027
        %v2029 = vpop.f32.mrb[0].mxu0
        %2030 = vmatprep.mubr.bf16.mxu0 0
        %2031 = vmatmul.mubr.bf16.gmra.mrb[0].mxu0 %v1883
        %v2032 = vpop.f32.mrb[0].mxu0
        %v2033 = vadd.f32 0.0, %v2032
        %v2034 = vpop.f32.mrb[0].mxu0
        %v2035 = vpop.f32.mrb[0].mxu0
        %v2036 = vadd.f32 0.0, %v2035
        %v2037 = vpop.f32.mrb[0].mxu0
        %2038 = vmatprep.mubr.bf16.mxu0 0
        %2039 = vmatmul.mubr.bf16.gmra.mrb[0].mxu0 %v1884
        %v2040 = vpop.f32.mrb[0].mxu0
        %v2041 = vadd.f32 0.0, %v2040
        %v2042 = vpop.f32.mrb[0].mxu0
        %v2043 = vpop.f32.mrb[0].mxu0
        %v2044 = vadd.f32 0.0, %v2043
        %v2045 = vpop.f32.mrb[0].mxu0
        %2046 = vdwg.mxu0
        %v2047 = vadd.f32 %v1843, %v1985
        %v2048 = vadd.f32 %v1844, %v1988
        %v2049 = vadd.f32 %v1845, %v1993
        %v2050 = vadd.f32 %v1846, %v1996
        %v2051 = vadd.f32 %v1847, %v2001
        %v2052 = vadd.f32 %v1848, %v2004
        %v2053 = vadd.f32 %v1849, %v2009
        %v2054 = vadd.f32 %v1850, %v2012
        %v2055 = vadd.f32 %v1851, %v2017
        %v2056 = vadd.f32 %v1852, %v2020
        %v2057 = vadd.f32 %v1853, %v2025
        %v2058 = vadd.f32 %v1854, %v2028
        %v2059 = vadd.f32 %v1855, %v2033
        %v2060 = vadd.f32 %v1856, %v2036
        %v2061 = vadd.f32 %v1857, %v2041
        %v2062 = vadd.f32 %v1858, %v2044
        %v2063 = vld [vmem:[%s254] sm:$0x1]
        %v2065 = vlaneseq
        %v2066 = vshrl.u32 %v2065, 7
        %v2067 = vsub.s32 0, %v2066
        %v2068 = vrot.slane %v2063, %v2067
        %v2070 = vmul.f32 %v2047, %v2068
        %v2071 = vmul.f32 %v2048, %v2068
        %v2072 = vmul.f32 %v2049, %v2068
        %v2073 = vmul.f32 %v2050, %v2068
        %v2074 = vmul.f32 %v2051, %v2068
        %v2075 = vmul.f32 %v2052, %v2068
        %v2076 = vmul.f32 %v2053, %v2068
        %v2077 = vmul.f32 %v2054, %v2068
        %v2078 = vmul.f32 %v2055, %v2068
        %v2079 = vmul.f32 %v2056, %v2068
        %v2080 = vmul.f32 %v2057, %v2068
        %v2081 = vmul.f32 %v2058, %v2068
        %v2082 = vmul.f32 %v2059, %v2068
        %v2083 = vmul.f32 %v2060, %v2068
        %v2084 = vmul.f32 %v2061, %v2068
        %v2085 = vmul.f32 %v2062, %v2068
        %v2086 = vld [vmem:[%s257] sm:$0x1]
        %v2088 = vlaneseq
        %v2089 = vshrl.u32 %v2088, 7
        %v2090 = vsub.s32 0, %v2089
        %v2091 = vrot.slane %v2086, %v2090
        %v2093 = vadd.f32 %v2070, %v2091
        %v2094 = vadd.f32 %v2071, %v2091
        %v2095 = vadd.f32 %v2072, %v2091
        %v2096 = vadd.f32 %v2073, %v2091
        %v2097 = vadd.f32 %v2074, %v2091
        %v2098 = vadd.f32 %v2075, %v2091
        %v2099 = vadd.f32 %v2076, %v2091
        %v2100 = vadd.f32 %v2077, %v2091
        %v2101 = vadd.f32 %v2078, %v2091
        %v2102 = vadd.f32 %v2079, %v2091
        %v2103 = vadd.f32 %v2080, %v2091
        %v2104 = vadd.f32 %v2081, %v2091
        %v2105 = vadd.f32 %v2082, %v2091
        %v2106 = vadd.f32 %v2083, %v2091
        %v2107 = vadd.f32 %v2084, %v2091
        %v2108 = vadd.f32 %v2085, %v2091
        %v2109 = vmax.f32 %v2093, 0.0
        %v2110 = vmax.f32 %v2094, 0.0
        %v2111 = vmax.f32 %v2095, 0.0
        %v2112 = vmax.f32 %v2096, 0.0
        %v2113 = vmax.f32 %v2097, 0.0
        %v2114 = vmax.f32 %v2098, 0.0
        %v2115 = vmax.f32 %v2099, 0.0
        %v2116 = vmax.f32 %v2100, 0.0
        %v2117 = vmax.f32 %v2101, 0.0
        %v2118 = vmax.f32 %v2102, 0.0
        %v2119 = vmax.f32 %v2103, 0.0
        %v2120 = vmax.f32 %v2104, 0.0
        %v2121 = vmax.f32 %v2105, 0.0
        %v2122 = vmax.f32 %v2106, 0.0
        %v2123 = vmax.f32 %v2107, 0.0
        %v2124 = vmax.f32 %v2108, 0.0
        %2125 = vst [vmem:[%s250] sm:$0xff] %v2109
        %2126 = vst [vmem:[%s250 + $0x8] sm:$0xff] %v2110
        %2127 = vst [vmem:[%s250 + $0x10] sm:$0xff] %v2111
        %2128 = vst [vmem:[%s250 + $0x18] sm:$0xff] %v2112
        %2129 = vst [vmem:[%s250 + $0x20] sm:$0xff] %v2113
        %2130 = vst [vmem:[%s250 + $0x28] sm:$0xff] %v2114
        %2131 = vst [vmem:[%s250 + $0x30] sm:$0xff] %v2115
        %2132 = vst [vmem:[%s250 + $0x38] sm:$0xff] %v2116
        %2133 = vst [vmem:[%s250 + $0x40] sm:$0xff] %v2117
        %2134 = vst [vmem:[%s250 + $0x48] sm:$0xff] %v2118
        %2135 = vst [vmem:[%s250 + $0x50] sm:$0xff] %v2119
        %2136 = vst [vmem:[%s250 + $0x58] sm:$0xff] %v2120
        %2137 = vst [vmem:[%s250 + $0x60] sm:$0xff] %v2121
        %2138 = vst [vmem:[%s250 + $0x68] sm:$0xff] %v2122
        %2139 = vst [vmem:[%s250 + $0x70] sm:$0xff] %v2123
        %2140 = vst [vmem:[%s250 + $0x78] sm:$0xff] %v2124
        %s2141 = sand.u32 %s141, 1
        %s2142 = scalar_lea.sflag [#allocation4], %s2141
        %s2143 = sand.u32 %s141, 1
        %s2144 = smul.addr %s2143, 128
        %s2145 = scalar_lea.vmem [#allocation7], %s2144
        // Predicated region
        $region45: #{tpu_custom_call.1} parent=35 // pred_check
          %p2146 = pneg %p151
        $region46: #{tpu_custom_call.1} parent=35 // pred_check_branch
          %2148 = sbr.rel (%p2146) target = $region48
        $region47: #{tpu_custom_call.1} parent=35 // pred_region
          %s2149 = smul.u32 16, %s24
          %s2151 = ssub.s32 2048, 2048
          %2152 = vsyncadd %s2142, %s2151
          %s2153 = sadd.s32 %s25, %s2149
          %s2154 = smul.addr %s2153, 128
          %s2155 = scalar_lea.hbm %s4, %s2154
          %s2156 = sshll.u32 %s2145, 4
          %s2157 = int_to_ptr.vmem [resolvable:$true] %s2156
          %2162 = dma.vmem_to_hbm [thread:$0]  %s2157, 2048, %s2155, %s2142, 128, 128, 8
        $region48: #{tpu_custom_call.1} parent=35 // pred_fallthru
          _
      $region36: #{tpu_custom_call.1} parent=5 // pred_fallthru
        _
      %p2163 = scmp.le.s32.totalorder 2, %s15
      // Predicated region
      $region49: #{tpu_custom_call.1} parent=5 // pred_check
        %p2164 = pneg %p2163
      $region50: #{tpu_custom_call.1} parent=5 // pred_check_branch
        %2166 = sbr.rel (%p2164) target = $region52
      $region51: #{tpu_custom_call.1} parent=5 // pred_region
        %s2167 = ssub.s32 %s15, 2
        // Predicated region
        $region53: #{tpu_custom_call.1} parent=51 // pred_check
          %p2168 = pneg %p157
        $region54: #{tpu_custom_call.1} parent=51 // pred_check_branch
          %2170 = sbr.rel (%p2168) target = $region56
        $region55: #{tpu_custom_call.1} parent=51 // pred_region
          %s2171 = sand.u32 %s142, 1
          %s2172 = scalar_lea.sflag [#allocation4], %s2171
          %s2173 = sand.u32 %s142, 1
          %s2174 = smul.addr %s2173, 128
          %s2175 = scalar_lea.vmem [#allocation7], %s2174
          %2176 = dma.done %s2172, 2048
        $region56: #{tpu_custom_call.1} parent=51 // pred_fallthru
          _
      $region52: #{tpu_custom_call.1} parent=5 // pred_fallthru
        _
    $region6: #{tpu_custom_call.1} parent=1 // loop_footer
      %s19 = sadd.s32 1, %s15
    $region7: #{tpu_custom_call.1} parent=1 // loop_footer_branch
      %14 = sbr.rel target = $region3
    $region8: #{tpu_custom_call.1} parent=1 // loop_exit
      _
    %2177 = vsyncpa [#allocation3], 1
    %s2178 = scalar_lea.sflag [#allocation3], 1
    %2179 = vsyncpa %s2178, 1
    %2180 = vsyncpa [#allocation6], 1
    %2181 = vsyncpa [#allocation4], 1
    %s2182 = scalar_lea.sflag [#allocation4], 1
    %2183 = vsyncpa %s2182, 1

</llo_original>
